<compile_context>
chip_gen: v7x
topology: tpu7x:2x2x1
jax: 0.10.0
libtpu: 0.0.40
codegen_flags: <defaults>
</compile_context>

<pallas_src>
import functools

import jax
import jax.numpy as jnp
from jax.experimental import pallas as pl
from jax.experimental.pallas import tpu as pltpu


def gsa_kernel(x_ref, w_ref, o_ref, *, heads, head_dim, n_valid):
    """Fused qkv projection + multi-head attention + head merge for a batch block.

    x_ref: (Bt, C, Np)  channel-major tokens of the subsampled frame, bf16, Np % 128 == 0
    w_ref: (3C, C)      qkv 1x1-conv weight (PyTorch (3C, C, 1, 1) layout, squeezed), bf16
    o_ref: (Bt, C, Np)  output, f32; output channel = h * head_dim + d
    """
    w = w_ref[...]                                   # (3C, C) bf16
    bt = x_ref.shape[0]
    n_pad = x_ref.shape[-1]
    hd = head_dim

    # Key-padding mask: tokens >= n_valid exist only for lane density; kill them in softmax.
    if n_pad != n_valid:
        key_ids = jax.lax.broadcasted_iota(jnp.int32, (1, n_pad), 1)
        key_bias = jnp.where(key_ids < n_valid, 0.0, -1e30).astype(jnp.float32)
    else:
        key_bias = None

    for b in range(bt):                              # static unroll over the batch block
        x = x_ref[b]                                 # (C, Np) bf16
        # 1x1 conv == matmul over the channel dim (MXU, bf16 operands, f32 accumulation).
        qkv = jax.lax.dot_general(w, x, (((1,), (0,)), ((), ())),
                                  preferred_element_type=jnp.float32)   # (3C, Np) f32
        qkv = qkv.astype(jnp.bfloat16)               # bf16 operands for the attention matmuls

        for h in range(heads):                       # static unroll: one grid step per batch block
            base = h * 3 * hd                        # PyTorch qkv channel order: h*3hd + j
            q = qkv[base:base + hd, :]               # (hd, Np)
            k = qkv[base + hd:base + 2 * hd, :]      # (hd, Np)
            v = qkv[base + 2 * hd:base + 3 * hd, :]  # (hd, Np)

            # scores[n, m] = sum_d q[d, n] * k[d, m]   (no 1/sqrt(hd): forward never applies it)
            s = jax.lax.dot_general(q, k, (((0,), (0,)), ((), ())),
                                    preferred_element_type=jnp.float32)  # (Np, Np) f32
            if key_bias is not None:
                s = s + key_bias                     # mask padded keys
            s = s - jnp.max(s, axis=-1, keepdims=True)
            p = jnp.exp(s)
            # divide -> EUP reciprocal + VPU multiply
            p = p * pl.reciprocal(jnp.sum(p, axis=-1, keepdims=True), approx=True)

            # out_h[d, n] = sum_m v[d, m] * p[n, m]   (== v @ attn^T)
            out_h = jax.lax.dot_general(v, p.astype(jnp.bfloat16), (((1,), (1,)), ((), ())),
                                        preferred_element_type=jnp.float32)  # (hd, Np) f32
            # Direct per-head store: no concatenate, no extra (C, Np) buffer.
            o_ref[b, h * hd:(h + 1) * hd, :] = out_h.astype(o_ref.dtype)


def _pick_batch_tile(B, C, Np):
    """Largest divisor of B that still leaves >= 2 grid steps (so v7x's two TensorCores
    both get work on the 'parallel' batch axis), capped so per-step blocks stay small."""
    if B < 2:
        return B
    best = 1
    for bt in range(1, B // 2 + 1):
        if B % bt != 0:
            continue
        # double-buffered bf16 input + f32 output block per step, rough cap
        if bt * C * Np * (2 + 4) * 2 > 8 * 1024 * 1024:
            continue
        best = bt
    return best


def global_sparse_attention(x_nchw, qkv_weight, *, r, heads, batch_block=None):
    """NCHW in -> NCHW (downsampled by r) out, matching the PyTorch module."""
    B, C, H, W = x_nchw.shape
    assert C % heads == 0
    hd = C // heads

    # AvgPool2d(kernel_size=1, stride=r) is a pure stride-r subsample (strided gather; done
    # in XLA because it is not expressible as a BlockSpec index_map). Result is r^2x smaller.
    xs = x_nchw[:, :, ::r, ::r]
    Hs, Ws = xs.shape[2], xs.shape[3]
    N = Hs * Ws
    xs = xs.reshape(B, C, N)                         # row-major merge: free reshape

    # Pad the token dim up to a lane-width multiple -> lane-dense (unmasked) loads/stores.
    Np = ((N + 127) // 128) * 128
    if Np != N:
        xs = jnp.pad(xs, ((0, 0), (0, 0), (0, Np - N)))

    xs = xs.astype(jnp.bfloat16)                     # bf16 operands, half the HBM/VMEM bytes
    w2d = qkv_weight.reshape(3 * C, C).astype(jnp.bfloat16)   # (3C, C, 1, 1) -> (3C, C)

    Bt = batch_block if batch_block is not None else _pick_batch_tile(B, C, Np)
    assert B % Bt == 0
    grid = (B // Bt,)

    out = pl.pallas_call(
        functools.partial(gsa_kernel, heads=heads, head_dim=hd, n_valid=N),
        out_shape=jax.ShapeDtypeStruct((B, C, Np), jnp.float32),
        grid=grid,
        in_specs=[
            pl.BlockSpec((Bt, C, Np), lambda i: (i, 0, 0)),
            pl.BlockSpec((3 * C, C), lambda i: (0, 0)),
        ],
        out_specs=pl.BlockSpec((Bt, C, Np), lambda i: (i, 0, 0)),
        compiler_params=pltpu.CompilerParams(
            dimension_semantics=("parallel",),       # batch axis shards over v7x's 2 TCs
            vmem_limit_bytes=64 * 1024 * 1024,
        ),
    )(xs, w2d)

    out = out[:, :, :N]                              # drop lane padding
    return out.reshape(B, C, Hs, Ws)                 # row-major split: free reshape


def reference_gsa(x, qkv_weight, r, heads):
    """Pure-JAX mirror of the PyTorch forward (f32, highest matmul precision)."""
    B, C, H, W = x.shape
    hd = C // heads
    hp = jax.lax.Precision.HIGHEST
    xs = x[:, :, ::r, ::r]
    Hs, Ws = xs.shape[2], xs.shape[3]
    w2 = qkv_weight.reshape(3 * C, C)
    qkv = jnp.einsum('oc,bchw->bohw', w2, xs, precision=hp)            # 1x1 conv
    qkv = qkv.reshape(B, heads, 3 * hd, Hs * Ws)                       # .view(B, heads, -1, HW)
    q, k, v = qkv[:, :, :hd], qkv[:, :, hd:2 * hd], qkv[:, :, 2 * hd:]
    attn = jax.nn.softmax(jnp.einsum('bhdn,bhdm->bhnm', q, k, precision=hp), axis=-1)
    out = jnp.einsum('bhdm,bhnm->bhdn', v, attn, precision=hp)         # v @ attn^T
    return out.reshape(B, C, Hs, Ws)


if __name__ == "__main__":
    B, C, H, W = 2, 32, 16, 16
    r, heads = 2, 4

    key = jax.random.PRNGKey(0)
    kx, kw = jax.random.split(key)
    x = jax.random.normal(kx, (B, C, H, W), jnp.float32)
    # nn.Conv2d(C, 3C, kernel_size=1, bias=False).weight has shape (3C, C, 1, 1)
    qkv_w = jax.random.normal(kw, (3 * C, C, 1, 1), jnp.float32) * 0.1

    fwd = jax.jit(functools.partial(global_sparse_attention, r=r, heads=heads))
    out = fwd(x, qkv_w)
    jax.block_until_ready(out)

    ref = reference_gsa(x, qkv_w, r, heads)
    assert out.shape == (B, C, H // r, W // r)
    assert jnp.all(jnp.isfinite(out))
    max_err = float(jnp.max(jnp.abs(out - ref)))
    assert jnp.allclose(out, ref, atol=2e-2, rtol=2e-2), max_err
    print("KERNEL_OK")
</pallas_src>

<mosaic_0001>
module attributes {stable_mosaic.version = 11 : i64} {
  func.func @gsa_kernel(%arg0: i32, %arg1: memref<1x32x128xbf16, #tpu.memory_space<vmem>>, %arg2: memref<96x32xbf16, #tpu.memory_space<vmem>>, %arg3: memref<1x32x128xf32, #tpu.memory_space<vmem>>) attributes {dimension_semantics = [#tpu.dimension_semantics<parallel>], iteration_bounds = array<i64: 2>, scalar_prefetch = 0 : i64, scratch_operands = 0 : i64, tpu.core_type = #tpu.core_type<tc>, window_params = [{transform_indices = @transform_0, window_bounds = array<i64: 1, 32, 128>}, {pipeline_mode = #tpu.pipeline_mode<synchronous>, transform_indices = @transform_1, window_bounds = array<i64: 96, 32>}, {transform_indices = @transform_2, window_bounds = array<i64: 1, 32, 128>}]} {
    %c0 = arith.constant 0 : index
    %c0_0 = arith.constant 0 : index
    %0 = vector.load %arg2[%c0, %c0_0] : memref<96x32xbf16, #tpu.memory_space<vmem>>, vector<96x32xbf16>
    %1 = tpu.iota {dimensions = array<i32: 1>} : vector<1x128xi32>
    %c64_i32 = arith.constant 64 : i32
    %2 = vector.broadcast %c64_i32 : i32 to vector<1x128xi32>
    %3 = arith.cmpi slt, %1, %2 : vector<1x128xi32>
    %cst = arith.constant 0.000000e+00 : f32
    %cst_1 = arith.constant -1.000000e+30 : f32
    %4 = vector.broadcast %cst : f32 to vector<1x128xf32>
    %5 = vector.broadcast %cst_1 : f32 to vector<1x128xf32>
    %6 = arith.select %3, %4, %5 : vector<1x128xi1>, vector<1x128xf32>
    %c0_2 = arith.constant 0 : index
    %c0_3 = arith.constant 0 : index
    %c0_4 = arith.constant 0 : index
    %7 = vector.load %arg1[%c0_2, %c0_3, %c0_4] : memref<1x32x128xbf16, #tpu.memory_space<vmem>>, vector<1x32x128xbf16>
    %8 = vector.shape_cast %7 : vector<1x32x128xbf16> to vector<32x128xbf16>
    %cst_5 = arith.constant dense<0.000000e+00> : vector<96x128xf32>
    %9 = tpu.matmul %0, %8, %cst_5 {dimension_numbers = #tpu.dot_dimension_numbers<[1], [0], [0], [1], [0, 0, 1, 1], [], []>} : vector<96x32xbf16>, vector<32x128xbf16>, vector<96x128xf32> -> vector<96x128xf32>
    %10 = arith.truncf %9 : vector<96x128xf32> to vector<96x128xbf16>
    %11 = vector.extract_strided_slice %10 {offsets = [0, 0], sizes = [8, 128], strides = [1, 1]} : vector<96x128xbf16> to vector<8x128xbf16>
    %12 = vector.extract_strided_slice %10 {offsets = [8, 0], sizes = [8, 128], strides = [1, 1]} : vector<96x128xbf16> to vector<8x128xbf16>
    %13 = vector.extract_strided_slice %10 {offsets = [16, 0], sizes = [8, 128], strides = [1, 1]} : vector<96x128xbf16> to vector<8x128xbf16>
    %cst_6 = arith.constant dense<0.000000e+00> : vector<128x128xf32>
    %14 = tpu.matmul %11, %12, %cst_6 {dimension_numbers = #tpu.dot_dimension_numbers<[0], [0], [1], [1], [0, 1, 1, 1], [], []>} : vector<8x128xbf16>, vector<8x128xbf16>, vector<128x128xf32> -> vector<128x128xf32>
    %15 = vector.broadcast %6 : vector<1x128xf32> to vector<128x128xf32>
    %16 = arith.addf %14, %15 : vector<128x128xf32>
    %cst_7 = arith.constant dense<0xFF800000> : vector<128xf32>
    %17 = vector.multi_reduction <maximumf>, %16, %cst_7 [1] : vector<128x128xf32> to vector<128xf32>
    %18 = vector.shape_cast %17 : vector<128xf32> to vector<128x1xf32>
    %19 = vector.broadcast %18 : vector<128x1xf32> to vector<128x128xf32>
    %20 = arith.subf %16, %19 : vector<128x128xf32>
    %21 = math.exp %20 : vector<128x128xf32>
    %cst_8 = arith.constant dense<0.000000e+00> : vector<128xf32>
    %22 = vector.multi_reduction <add>, %21, %cst_8 [1] : vector<128x128xf32> to vector<128xf32>
    %23 = vector.shape_cast %22 : vector<128xf32> to vector<128x1xf32>
    %24 = tpu.reciprocal %23 {approx = true} : vector<128x1xf32> -> vector<128x1xf32>
    %25 = vector.broadcast %24 : vector<128x1xf32> to vector<128x128xf32>
    %26 = arith.mulf %21, %25 : vector<128x128xf32>
    %27 = arith.truncf %26 : vector<128x128xf32> to vector<128x128xbf16>
    %cst_9 = arith.constant dense<0.000000e+00> : vector<8x128xf32>
    %28 = tpu.matmul %13, %27, %cst_9 {dimension_numbers = #tpu.dot_dimension_numbers<[1], [1], [0], [0], [0, 0, 1, 0], [], []>} : vector<8x128xbf16>, vector<128x128xbf16>, vector<8x128xf32> -> vector<8x128xf32>
    %c0_10 = arith.constant 0 : index
    %c0_11 = arith.constant 0 : index
    %c0_12 = arith.constant 0 : index
    %29 = vector.load %arg3[%c0_10, %c0_11, %c0_12] : memref<1x32x128xf32, #tpu.memory_space<vmem>>, vector<1x8x128xf32>
    %30 = vector.shape_cast %29 : vector<1x8x128xf32> to vector<8x128xf32>
    %31 = vector.shape_cast %28 : vector<8x128xf32> to vector<1x8x128xf32>
    tpu.vector_store %arg3[%c0_10, %c0_11, %c0_12], %31 {strides = array<i32>} : memref<1x32x128xf32, #tpu.memory_space<vmem>>, vector<1x8x128xf32>,
    %32 = vector.extract_strided_slice %10 {offsets = [24, 0], sizes = [8, 128], strides = [1, 1]} : vector<96x128xbf16> to vector<8x128xbf16>
    %33 = vector.extract_strided_slice %10 {offsets = [32, 0], sizes = [8, 128], strides = [1, 1]} : vector<96x128xbf16> to vector<8x128xbf16>
    %34 = vector.extract_strided_slice %10 {offsets = [40, 0], sizes = [8, 128], strides = [1, 1]} : vector<96x128xbf16> to vector<8x128xbf16>
    %cst_13 = arith.constant dense<0.000000e+00> : vector<128x128xf32>
    %35 = tpu.matmul %32, %33, %cst_13 {dimension_numbers = #tpu.dot_dimension_numbers<[0], [0], [1], [1], [0, 1, 1, 1], [], []>} : vector<8x128xbf16>, vector<8x128xbf16>, vector<128x128xf32> -> vector<128x128xf32>
    %36 = vector.broadcast %6 : vector<1x128xf32> to vector<128x128xf32>
    %37 = arith.addf %35, %36 : vector<128x128xf32>
    %cst_14 = arith.constant dense<0xFF800000> : vector<128xf32>
    %38 = vector.multi_reduction <maximumf>, %37, %cst_14 [1] : vector<128x128xf32> to vector<128xf32>
    %39 = vector.shape_cast %38 : vector<128xf32> to vector<128x1xf32>
    %40 = vector.broadcast %39 : vector<128x1xf32> to vector<128x128xf32>
    %41 = arith.subf %37, %40 : vector<128x128xf32>
    %42 = math.exp %41 : vector<128x128xf32>
    %cst_15 = arith.constant dense<0.000000e+00> : vector<128xf32>
    %43 = vector.multi_reduction <add>, %42, %cst_15 [1] : vector<128x128xf32> to vector<128xf32>
    %44 = vector.shape_cast %43 : vector<128xf32> to vector<128x1xf32>
    %45 = tpu.reciprocal %44 {approx = true} : vector<128x1xf32> -> vector<128x1xf32>
    %46 = vector.broadcast %45 : vector<128x1xf32> to vector<128x128xf32>
    %47 = arith.mulf %42, %46 : vector<128x128xf32>
    %48 = arith.truncf %47 : vector<128x128xf32> to vector<128x128xbf16>
    %cst_16 = arith.constant dense<0.000000e+00> : vector<8x128xf32>
    %49 = tpu.matmul %34, %48, %cst_16 {dimension_numbers = #tpu.dot_dimension_numbers<[1], [1], [0], [0], [0, 0, 1, 0], [], []>} : vector<8x128xbf16>, vector<128x128xbf16>, vector<8x128xf32> -> vector<8x128xf32>
    %c0_17 = arith.constant 0 : index
    %c8 = arith.constant 8 : index
    %c0_18 = arith.constant 0 : index
    %50 = vector.load %arg3[%c0_17, %c8, %c0_18] : memref<1x32x128xf32, #tpu.memory_space<vmem>>, vector<1x8x128xf32>
    %51 = vector.shape_cast %50 : vector<1x8x128xf32> to vector<8x128xf32>
    %52 = vector.shape_cast %49 : vector<8x128xf32> to vector<1x8x128xf32>
    tpu.vector_store %arg3[%c0_17, %c8, %c0_18], %52 {strides = array<i32>} : memref<1x32x128xf32, #tpu.memory_space<vmem>>, vector<1x8x128xf32>,
    %53 = vector.extract_strided_slice %10 {offsets = [48, 0], sizes = [8, 128], strides = [1, 1]} : vector<96x128xbf16> to vector<8x128xbf16>
    %54 = vector.extract_strided_slice %10 {offsets = [56, 0], sizes = [8, 128], strides = [1, 1]} : vector<96x128xbf16> to vector<8x128xbf16>
    %55 = vector.extract_strided_slice %10 {offsets = [64, 0], sizes = [8, 128], strides = [1, 1]} : vector<96x128xbf16> to vector<8x128xbf16>
    %cst_19 = arith.constant dense<0.000000e+00> : vector<128x128xf32>
    %56 = tpu.matmul %53, %54, %cst_19 {dimension_numbers = #tpu.dot_dimension_numbers<[0], [0], [1], [1], [0, 1, 1, 1], [], []>} : vector<8x128xbf16>, vector<8x128xbf16>, vector<128x128xf32> -> vector<128x128xf32>
    %57 = vector.broadcast %6 : vector<1x128xf32> to vector<128x128xf32>
    %58 = arith.addf %56, %57 : vector<128x128xf32>
    %cst_20 = arith.constant dense<0xFF800000> : vector<128xf32>
    %59 = vector.multi_reduction <maximumf>, %58, %cst_20 [1] : vector<128x128xf32> to vector<128xf32>
    %60 = vector.shape_cast %59 : vector<128xf32> to vector<128x1xf32>
    %61 = vector.broadcast %60 : vector<128x1xf32> to vector<128x128xf32>
    %62 = arith.subf %58, %61 : vector<128x128xf32>
    %63 = math.exp %62 : vector<128x128xf32>
    %cst_21 = arith.constant dense<0.000000e+00> : vector<128xf32>
    %64 = vector.multi_reduction <add>, %63, %cst_21 [1] : vector<128x128xf32> to vector<128xf32>
    %65 = vector.shape_cast %64 : vector<128xf32> to vector<128x1xf32>
    %66 = tpu.reciprocal %65 {approx = true} : vector<128x1xf32> -> vector<128x1xf32>
    %67 = vector.broadcast %66 : vector<128x1xf32> to vector<128x128xf32>
    %68 = arith.mulf %63, %67 : vector<128x128xf32>
    %69 = arith.truncf %68 : vector<128x128xf32> to vector<128x128xbf16>
    %cst_22 = arith.constant dense<0.000000e+00> : vector<8x128xf32>
    %70 = tpu.matmul %55, %69, %cst_22 {dimension_numbers = #tpu.dot_dimension_numbers<[1], [1], [0], [0], [0, 0, 1, 0], [], []>} : vector<8x128xbf16>, vector<128x128xbf16>, vector<8x128xf32> -> vector<8x128xf32>
    %c0_23 = arith.constant 0 : index
    %c16 = arith.constant 16 : index
    %c0_24 = arith.constant 0 : index
    %71 = vector.load %arg3[%c0_23, %c16, %c0_24] : memref<1x32x128xf32, #tpu.memory_space<vmem>>, vector<1x8x128xf32>
    %72 = vector.shape_cast %71 : vector<1x8x128xf32> to vector<8x128xf32>
    %73 = vector.shape_cast %70 : vector<8x128xf32> to vector<1x8x128xf32>
    tpu.vector_store %arg3[%c0_23, %c16, %c0_24], %73 {strides = array<i32>} : memref<1x32x128xf32, #tpu.memory_space<vmem>>, vector<1x8x128xf32>,
    %74 = vector.extract_strided_slice %10 {offsets = [72, 0], sizes = [8, 128], strides = [1, 1]} : vector<96x128xbf16> to vector<8x128xbf16>
    %75 = vector.extract_strided_slice %10 {offsets = [80, 0], sizes = [8, 128], strides = [1, 1]} : vector<96x128xbf16> to vector<8x128xbf16>
    %76 = vector.extract_strided_slice %10 {offsets = [88, 0], sizes = [8, 128], strides = [1, 1]} : vector<96x128xbf16> to vector<8x128xbf16>
    %cst_25 = arith.constant dense<0.000000e+00> : vector<128x128xf32>
    %77 = tpu.matmul %74, %75, %cst_25 {dimension_numbers = #tpu.dot_dimension_numbers<[0], [0], [1], [1], [0, 1, 1, 1], [], []>} : vector<8x128xbf16>, vector<8x128xbf16>, vector<128x128xf32> -> vector<128x128xf32>
    %78 = vector.broadcast %6 : vector<1x128xf32> to vector<128x128xf32>
    %79 = arith.addf %77, %78 : vector<128x128xf32>
    %cst_26 = arith.constant dense<0xFF800000> : vector<128xf32>
    %80 = vector.multi_reduction <maximumf>, %79, %cst_26 [1] : vector<128x128xf32> to vector<128xf32>
    %81 = vector.shape_cast %80 : vector<128xf32> to vector<128x1xf32>
    %82 = vector.broadcast %81 : vector<128x1xf32> to vector<128x128xf32>
    %83 = arith.subf %79, %82 : vector<128x128xf32>
    %84 = math.exp %83 : vector<128x128xf32>
    %cst_27 = arith.constant dense<0.000000e+00> : vector<128xf32>
    %85 = vector.multi_reduction <add>, %84, %cst_27 [1] : vector<128x128xf32> to vector<128xf32>
    %86 = vector.shape_cast %85 : vector<128xf32> to vector<128x1xf32>
    %87 = tpu.reciprocal %86 {approx = true} : vector<128x1xf32> -> vector<128x1xf32>
    %88 = vector.broadcast %87 : vector<128x1xf32> to vector<128x128xf32>
    %89 = arith.mulf %84, %88 : vector<128x128xf32>
    %90 = arith.truncf %89 : vector<128x128xf32> to vector<128x128xbf16>
    %cst_28 = arith.constant dense<0.000000e+00> : vector<8x128xf32>
    %91 = tpu.matmul %76, %90, %cst_28 {dimension_numbers = #tpu.dot_dimension_numbers<[1], [1], [0], [0], [0, 0, 1, 0], [], []>} : vector<8x128xbf16>, vector<128x128xbf16>, vector<8x128xf32> -> vector<8x128xf32>
    %c0_29 = arith.constant 0 : index
    %c24 = arith.constant 24 : index
    %c0_30 = arith.constant 0 : index
    %92 = vector.load %arg3[%c0_29, %c24, %c0_30] : memref<1x32x128xf32, #tpu.memory_space<vmem>>, vector<1x8x128xf32>
    %93 = vector.shape_cast %92 : vector<1x8x128xf32> to vector<8x128xf32>
    %94 = vector.shape_cast %91 : vector<8x128xf32> to vector<1x8x128xf32>
    tpu.vector_store %arg3[%c0_29, %c24, %c0_30], %94 {strides = array<i32>} : memref<1x32x128xf32, #tpu.memory_space<vmem>>, vector<1x8x128xf32>,
    return
  }
  func.func @transform_0(%arg0: i32) -> (i32, i32, i32) {
    %c0_i32 = arith.constant 0 : i32
    %c0_i32_0 = arith.constant 0 : i32
    %c0_i32_1 = arith.constant 0 : i32
    return %arg0, %c0_i32, %c0_i32_0 : i32, i32, i32
  }
  func.func @transform_1(%arg0: i32) -> (i32, i32) {
    %c0_i32 = arith.constant 0 : i32
    %c0_i32_0 = arith.constant 0 : i32
    %c0_i32_1 = arith.constant 0 : i32
    return %c0_i32, %c0_i32_0 : i32, i32
  }
  func.func @transform_2(%arg0: i32) -> (i32, i32, i32) {
    %c0_i32 = arith.constant 0 : i32
    %c0_i32_0 = arith.constant 0 : i32
    %c0_i32_1 = arith.constant 0 : i32
    return %arg0, %c0_i32, %c0_i32_0 : i32, i32, i32
  }
}

</mosaic_0001>

<llo_original>
// kernel: global_sparse_attention.1
$region0: #{global_sparse_attention.1}
  #allocation0 [shape = 'u32[]', space=smem, size = 0x4, offset = 0x4, fixed_abs, tag = 'smem constant byte address 0x4 - core index']
  #allocation1 [shape = 'u32[144,128]{1,0:T(1,128)}', space=vmem, size = 0x12000, scoped, tag = 'internal scratch']
  %s0 = inlined_call_operand.hbm [shape: bf16[2,32,128], index: 0, kind: input, shape index: {}]
  %s1 = inlined_call_operand.hbm [shape: bf16[96,32], index: 1, kind: input, shape index: {}]
  %s2 = inlined_call_operand.hbm [shape: f32[2,32,128], index: 2, kind: output, shape index: {}]
  %s3 = sld [smem:[#allocation0]]
  $region49: #{global_sparse_attention.1} parent=0
    _
  %s5 = ssub.s32 1, %s3
  %s6 = scalar_select 0, %s5, %s3
  $region1: #{global_sparse_attention.1} parent=0
    #allocation2 [shape = 'u8[16384]{0}', space=vmem, size = 0x4000, scoped, tag = 'input window, operand 0']
    #allocation3 [shape = 's32[2]{0}', space=sflag, size = 0x8, scoped, tag = 'scoped memory for global_sparse_attention.1']
    #allocation4 [shape = 's32[2]{0}', space=sflag, size = 0x8, scoped, tag = 'scoped memory for global_sparse_attention.1']
    #allocation5 [shape = 'u8[24576]{0}', space=vmem, size = 0x6000, scoped, tag = 'input window, operand 1, single buffered']
    #allocation6 [shape = 's32[1]{0}', space=sflag, size = 0x4, scoped, tag = 'scoped memory for global_sparse_attention.1']
    #allocation7 [shape = 'u8[32768]{0}', space=vmem, size = 0x8000, scoped, tag = 'output window, operand 0']
    %7 = vsyncpa [#allocation3], 0
    %s8 = scalar_lea.sflag [#allocation3], 1
    %9 = vsyncpa %s8, 0
    %10 = vsyncpa [#allocation6], 0
    %11 = vsyncpa [#allocation4], 0
    %s12 = scalar_lea.sflag [#allocation4], 1
    %13 = vsyncpa %s12, 0
    loop: start=0, step=1, limit=4
    $region2: #{global_sparse_attention.1} parent=1 // loop_pre_header
      _
    $region3: #{global_sparse_attention.1} parent=1 // loop_header
      %s15 = sphi 0, %s19
      %p16 = scmp.ge.s32.totalorder %s15, 4
      %s25 = sphi 0, %s27
      %s28 = sphi 0, %s25
      %s29 = sphi 0, %s28
      %s45 = sphi 0, %s29
      %s49 = sphi 0, %s49
      %s51 = sphi 0, %s49
      %s52 = sphi 0, %s51
      %s66 = sphi 0, %s52
      %s72 = sphi 0, %s74
      %s75 = sphi 0, %s72
      %s76 = sphi 0, %s75
      %s92 = sphi 0, %s76
    $region4: #{global_sparse_attention.1} parent=1 // loop_header_branch
      %18 = sbr.rel (%p16) target = $region8
    $region5: #{global_sparse_attention.1} parent=1 // loop_body
      %s20 = ssub.s32 %s15, 1
      %s21 = ssub.s32 %s15, 2
      %s22 = sadd.s32 %s15, 1
      %s23 = ssub.s32 %s15, %s22
      %p24 = scmp.eq.s32.totalorder %s23, 0
      %s26 = sadd.s32 %s25, 1
      %s27 = scalar_select %p24, %s25, %s26
      %p30 = pneg %p24
      %p31 = scmp.eq.s32.totalorder %s15, 1
      %p32 = por %p30, %p31
      %p33 = scmp.ne.s32.totalorder %s25, %s28
      %p34 = scmp.eq.s32.totalorder %s15, 0
      %p35 = por %p33, %p34
      %p36 = scmp.ne.s32.totalorder %s25, %s28
      %p37 = scmp.eq.s32.totalorder %s20, 1
      %p38 = por %p36, %p37
      %p39 = scmp.ne.s32.totalorder %s28, %s29
      %p40 = scmp.eq.s32.totalorder %s20, 0
      %p41 = por %p39, %p40
      %p42 = scmp.ne.s32.totalorder %s28, %s29
      %p43 = scmp.eq.s32.totalorder %s21, 1
      %p44 = por %p42, %p43
      %p46 = scmp.ne.s32.totalorder %s29, %s45
      %p47 = scmp.eq.s32.totalorder %s21, 0
      %p48 = por %p46, %p47
      %s50 = sadd.s32 %s49, 1
      %p53 = scmp.eq.s32.totalorder %s15, 1
      %p54 = scmp.ne.s32.totalorder %s49, %s51
      %p55 = scmp.eq.s32.totalorder %s15, 0
      %p56 = por %p54, %p55
      %p57 = scmp.ne.s32.totalorder %s49, %s51
      %p58 = scmp.eq.s32.totalorder %s20, 1
      %p59 = por %p57, %p58
      %p60 = scmp.ne.s32.totalorder %s51, %s52
      %p61 = scmp.eq.s32.totalorder %s20, 0
      %p62 = por %p60, %p61
      %p63 = scmp.ne.s32.totalorder %s51, %s52
      %p64 = scmp.eq.s32.totalorder %s21, 1
      %p65 = por %p63, %p64
      %p67 = scmp.ne.s32.totalorder %s52, %s66
      %p68 = scmp.eq.s32.totalorder %s21, 0
      %p69 = por %p67, %p68
      %s70 = ssub.s32 %s15, %s22
      %p71 = scmp.eq.s32.totalorder %s70, 0
      %s73 = sadd.s32 %s72, 1
      %s74 = scalar_select %p71, %s72, %s73
      %p77 = pneg %p71
      %p78 = scmp.eq.s32.totalorder %s15, 1
      %p79 = por %p77, %p78
      %p80 = scmp.ne.s32.totalorder %s72, %s75
      %p81 = scmp.eq.s32.totalorder %s15, 0
      %p82 = por %p80, %p81
      %p83 = scmp.ne.s32.totalorder %s72, %s75
      %p84 = scmp.eq.s32.totalorder %s20, 1
      %p85 = por %p83, %p84
      %p86 = scmp.ne.s32.totalorder %s75, %s76
      %p87 = scmp.eq.s32.totalorder %s20, 0
      %p88 = por %p86, %p87
      %p89 = scmp.ne.s32.totalorder %s75, %s76
      %p90 = scmp.eq.s32.totalorder %s21, 1
      %p91 = por %p89, %p90
      %p93 = scmp.ne.s32.totalorder %s76, %s92
      %p94 = scmp.eq.s32.totalorder %s21, 0
      %p95 = por %p93, %p94
      %p96 = scmp.le.s32.totalorder 1, %s15
      %p97 = scmp.lt.s32.totalorder %s15, 3
      %p98 = pnand %p96, %p97
      %p99 = pneg %p98
      // Predicated region
      $region9: #{global_sparse_attention.1} parent=5 // pred_check
        _
      $region10: #{global_sparse_attention.1} parent=5 // pred_check_branch
        %101 = sbr.rel (%p98) target = $region12
      $region11: #{global_sparse_attention.1} parent=5 // pred_region
        %s102 = ssub.s32 %s15, 1
        // Predicated region
        $region13: #{global_sparse_attention.1} parent=11 // pred_check
          %p103 = pneg %p62
        $region14: #{global_sparse_attention.1} parent=11 // pred_check_branch
          %105 = sbr.rel (%p103) target = $region16
        $region15: #{global_sparse_attention.1} parent=11 // pred_region
          %s107 = ssub.s32 768, 768
          %108 = vsyncadd [#allocation6], %s107
          %s109 = sshll.u32 [#allocation5], 4
          %s110 = int_to_ptr.vmem [resolvable:$true] %s109
          %115 = dma.hbm_to_vmem [thread:$0]  %s1, 768, %s110, [#allocation6], 64, 64, 4
        $region16: #{global_sparse_attention.1} parent=11 // pred_fallthru
          _
      $region12: #{global_sparse_attention.1} parent=5 // pred_fallthru
        _
      %p116 = scmp.lt.s32.totalorder %s15, 2
      // Predicated region
      $region17: #{global_sparse_attention.1} parent=5 // pred_check
        %p117 = pneg %p116
      $region18: #{global_sparse_attention.1} parent=5 // pred_check_branch
        %119 = sbr.rel (%p117) target = $region20
      $region19: #{global_sparse_attention.1} parent=5 // pred_region
        // Predicated region
        $region21: #{global_sparse_attention.1} parent=19 // pred_check
          %p120 = pneg %p35
        $region22: #{global_sparse_attention.1} parent=19 // pred_check_branch
          %122 = sbr.rel (%p120) target = $region24
        $region23: #{global_sparse_attention.1} parent=19 // pred_region
          %s123 = sand.u32 %s25, 1
          %s124 = scalar_lea.sflag [#allocation3], %s123
          %s125 = sand.u32 %s25, 1
          %s126 = smul.addr %s125, 16
          %s127 = scalar_lea.vmem [#allocation2], %s126
          %s129 = ssub.s32 256, 256
          %130 = vsyncadd %s124, %s129
          %s131 = smul.addr %s15, 4
          %s132 = smul.addr %s131, 64
          %s133 = scalar_lea.hbm %s0, %s132
          %s134 = sshll.u32 %s127, 4
          %s135 = int_to_ptr.vmem [resolvable:$true] %s134
          %140 = dma.hbm_to_vmem [thread:$0]  %s133, 256, %s135, %s124, 64, 64, 4
        $region24: #{global_sparse_attention.1} parent=19 // pred_fallthru
          _
      $region20: #{global_sparse_attention.1} parent=5 // pred_fallthru
        _
      %p141 = scmp.le.s32.totalorder 1, %s15
      %p142 = scmp.lt.s32.totalorder %s15, 3
      %p143 = pnand %p141, %p142
      %p144 = pneg %p143
      // Predicated region
      $region25: #{global_sparse_attention.1} parent=5 // pred_check
        _
      $region26: #{global_sparse_attention.1} parent=5 // pred_check_branch
        %146 = sbr.rel (%p143) target = $region28
      $region27: #{global_sparse_attention.1} parent=5 // pred_region
        %s147 = ssub.s32 %s15, 1
        %s148 = sand.u32 %s28, 1
        %s149 = scalar_lea.sflag [#allocation3], %s148
        %s150 = sand.u32 %s28, 1
        %s151 = smul.addr %s150, 16
        %s152 = scalar_lea.vmem [#allocation2], %s151
        // Predicated region
        $region29: #{global_sparse_attention.1} parent=27 // pred_check
          %p153 = pneg %p41
        $region30: #{global_sparse_attention.1} parent=27 // pred_check_branch
          %155 = sbr.rel (%p153) target = $region32
        $region31: #{global_sparse_attention.1} parent=27 // pred_region
          %156 = dma.done %s149, 256
        $region32: #{global_sparse_attention.1} parent=27 // pred_fallthru
          _
        // Predicated region
        $region33: #{global_sparse_attention.1} parent=27 // pred_check
          %p157 = pneg %p62
        $region34: #{global_sparse_attention.1} parent=27 // pred_check_branch
          %159 = sbr.rel (%p157) target = $region36
        $region35: #{global_sparse_attention.1} parent=27 // pred_region
          %160 = dma.done [#allocation6], 768
        $region36: #{global_sparse_attention.1} parent=27 // pred_fallthru
          _
        %s161 = sand.u32 %s28, 1
        %s162 = scalar_lea.sflag [#allocation3], %s161
        %s163 = sand.u32 %s28, 1
        %s164 = smul.addr %s163, 16
        %s165 = scalar_lea.vmem [#allocation2], %s164
        %p166 = pneg %p41
        %p167 = pneg %p38
        %p168 = pneg %p62
        %p169 = pneg %p59
        %p170 = pneg %p88
        %p171 = pneg %p85
        %s172 = sand.u32 %s75, 1
        %s173 = scalar_lea.sflag [#allocation4], %s172
        %s174 = sand.u32 %s75, 1
        %s175 = smul.addr %s174, 32
        %s176 = scalar_lea.vmem [#allocation7], %s175
        %v178 = vld [vmem:[#allocation5] sm:$0xf]
        %v179 = vld [vmem:[#allocation5 + $0x4] sm:$0xf]
        %v180 = vld [vmem:[#allocation5 + $0x8] sm:$0xf]
        %v181 = vld [vmem:[#allocation5 + $0xc] sm:$0xf]
        %v182 = vld [vmem:[#allocation5 + $0x10] sm:$0xf]
        %v183 = vld [vmem:[#allocation5 + $0x14] sm:$0xf]
        %v184 = vld [vmem:[#allocation5 + $0x18] sm:$0xf]
        %v185 = vld [vmem:[#allocation5 + $0x1c] sm:$0xf]
        %v186 = vld [vmem:[#allocation5 + $0x20] sm:$0xf]
        %v187 = vld [vmem:[#allocation5 + $0x24] sm:$0xf]
        %v188 = vld [vmem:[#allocation5 + $0x28] sm:$0xf]
        %v189 = vld [vmem:[#allocation5 + $0x2c] sm:$0xf]
        %v190 = vlaneseq
        %v191 = vand.u32 %v190, 127
        %vm192 = vcmp.lt.s32.totalorder %v191, 64
        %v193 = vsel %vm192, 0.0, -1e+30
        %v194 = vld [vmem:[%s152] sm:$0xf]
        %v195 = vld [vmem:[%s152 + $0x4] sm:$0xf]
        %v196 = vld [vmem:[%s152 + $0x8] sm:$0xf]
        %v197 = vld [vmem:[%s152 + $0xc] sm:$0xf]
        %v210 = vunpack.c.l.b16 %v178
        %v211 = vunpack.c.l.b16 %v179
        %v212 = vunpack.c.l.b16 %v180
        %v213 = vunpack.c.l.b16 %v181
        %v214 = vunpack.c.l.b16 %v182
        %v215 = vunpack.c.l.b16 %v183
        %v216 = vunpack.c.l.b16 %v184
        %v217 = vunpack.c.l.b16 %v185
        %v218 = vunpack.c.l.b16 %v186
        %v219 = vunpack.c.l.b16 %v187
        %v220 = vunpack.c.l.b16 %v188
        %v221 = vunpack.c.l.b16 %v189
        %v222 = vpack.c.b16 %v211, %v210
        %v223 = vpack.c.b16 %v213, %v212
        %v224 = vpack.c.b16 %v215, %v214
        %v225 = vpack.c.b16 %v217, %v216
        %v226 = vpack.c.b16 %v219, %v218
        %v227 = vpack.c.b16 %v221, %v220
        %v232 = vunpack.c.l.b16 %v194
        %v233 = vunpack.c.l.b16 %v195
        %v234 = vunpack.c.l.b16 %v196
        %v235 = vunpack.c.l.b16 %v197
        %v236 = vpack.c.b16 %v233, %v232
        %v237 = vpack.c.b16 %v235, %v234
        %vm240 = vcmask 261120
        %v242 = vsel %vm240, %v222, 0
        %v245 = vsel %vm240, %v223, 0
        %v248 = vsel %vm240, %v224, 0
        %v251 = vsel %vm240, %v225, 0
        %v254 = vsel %vm240, %v226, 0
        %v257 = vsel %vm240, %v227, 0
        %259 = vmatprep.subr.bf16.mxu0 0
        %260 = vmatpush1.bf16.msra.mxu0 %v236
        %261 = vmatprep.subr.bf16.mxu0 0
        %262 = vmatpush1.bf16.msra.mxu0 %v237
        %263 = vmatprep.subr.bf16.mxu0 0
        %264 = vmatpush1.bf16.msra.mxu0 0
        %265 = vmatprep.subr.bf16.mxu0 0
        %266 = vmatpush1.bf16.msra.mxu0 0
        %267 = vmatprep.subr.bf16.mxu0 0
        %268 = vmatpush1.bf16.msra.mxu0 0
        %269 = vmatprep.subr.bf16.mxu0 0
        %270 = vmatpush1.bf16.msra.mxu0 0
        %271 = vmatprep.subr.bf16.mxu0 0
        %272 = vmatpush1.bf16.msra.mxu0 0
        %273 = vmatprep.subr.bf16.mxu0 0
        %274 = vmatpush1.bf16.msra.mxu0 0
        %275 = vmatprep.subr.bf16.mxu0 0
        %276 = vmatpush1.bf16.msra.mxu0 0
        %277 = vmatprep.subr.bf16.mxu0 0
        %278 = vmatpush1.bf16.msra.mxu0 0
        %279 = vmatprep.subr.bf16.mxu0 0
        %280 = vmatpush1.bf16.msra.mxu0 0
        %281 = vmatprep.subr.bf16.mxu0 0
        %282 = vmatpush1.bf16.msra.mxu0 0
        %283 = vmatprep.subr.bf16.mxu0 0
        %284 = vmatpush1.bf16.msra.mxu0 0
        %285 = vmatprep.subr.bf16.mxu0 0
        %286 = vmatpush1.bf16.msra.mxu0 0
        %287 = vmatprep.subr.bf16.mxu0 0
        %288 = vmatpush1.bf16.msra.mxu0 0
        %289 = vmatprep.subr.bf16.mxu0 0
        %290 = vmatpush1.bf16.msra.mxu0 0
        %291 = vmatprep.mubr.bf16.mxu0 0
        %292 = vmatmul.mubr.bf16.gmra.mrb[0].mxu0 %v242
        %v293 = vpop.f32.mrb[0].mxu0
        %v294 = vadd.f32 0.0, %v293
        %v295 = vpop.f32.mrb[0].mxu0
        %v296 = vpop.f32.mrb[0].mxu0
        %v297 = vadd.f32 0.0, %v296
        %v298 = vpop.f32.mrb[0].mxu0
        %299 = vmatprep.mubr.bf16.mxu0 0
        %300 = vmatmul.mubr.bf16.gmra.mrb[0].mxu0 %v245
        %v301 = vpop.f32.mrb[0].mxu0
        %v302 = vadd.f32 0.0, %v301
        %v303 = vpop.f32.mrb[0].mxu0
        %v304 = vpop.f32.mrb[0].mxu0
        %v305 = vadd.f32 0.0, %v304
        %v306 = vpop.f32.mrb[0].mxu0
        %307 = vmatprep.mubr.bf16.mxu0 0
        %308 = vmatmul.mubr.bf16.gmra.mrb[0].mxu0 %v248
        %v309 = vpop.f32.mrb[0].mxu0
        %v310 = vadd.f32 0.0, %v309
        %v311 = vpop.f32.mrb[0].mxu0
        %v312 = vpop.f32.mrb[0].mxu0
        %v313 = vadd.f32 0.0, %v312
        %v314 = vpop.f32.mrb[0].mxu0
        %315 = vmatprep.mubr.bf16.mxu0 0
        %316 = vmatmul.mubr.bf16.gmra.mrb[0].mxu0 %v251
        %v317 = vpop.f32.mrb[0].mxu0
        %v318 = vadd.f32 0.0, %v317
        %v319 = vpop.f32.mrb[0].mxu0
        %v320 = vpop.f32.mrb[0].mxu0
        %v321 = vadd.f32 0.0, %v320
        %v322 = vpop.f32.mrb[0].mxu0
        %323 = vmatprep.mubr.bf16.mxu0 0
        %324 = vmatmul.mubr.bf16.gmra.mrb[0].mxu0 %v254
        %v325 = vpop.f32.mrb[0].mxu0
        %v326 = vadd.f32 0.0, %v325
        %v327 = vpop.f32.mrb[0].mxu0
        %v328 = vpop.f32.mrb[0].mxu0
        %v329 = vadd.f32 0.0, %v328
        %v330 = vpop.f32.mrb[0].mxu0
        %331 = vmatprep.mubr.bf16.mxu0 0
        %332 = vmatmul.mubr.bf16.gmra.mrb[0].mxu0 %v257
        %v333 = vpop.f32.mrb[0].mxu0
        %v334 = vadd.f32 0.0, %v333
        %v335 = vpop.f32.mrb[0].mxu0
        %v336 = vpop.f32.mrb[0].mxu0
        %v337 = vadd.f32 0.0, %v336
        %v338 = vpop.f32.mrb[0].mxu0
        %339 = vdwg.mxu0
        %v340 = vpack.c.bf16 %v297, %v294
        %v341 = vpack.c.bf16 %v305, %v302
        %v342 = vpack.c.bf16 %v313, %v310
        %v343 = vpack.c.bf16 %v321, %v318
        %v344 = vpack.c.bf16 %v329, %v326
        %v345 = vpack.c.bf16 %v337, %v334
        %346 = vxpose.xlu0.c.b16.start [1/8] %v340, 128
        %347 = vxpose.xlu0.c.b16.cont [2/8] 0, 128
        %348 = vxpose.xlu0.c.b16.cont [3/8] 0, 128
        %349 = vxpose.xlu0.c.b16.cont [4/8] 0, 128
        %350 = vxpose.xlu0.c.b16.cont [5/8] 0, 128
        %351 = vxpose.xlu0.c.b16.cont [6/8] 0, 128
        %352 = vxpose.xlu0.c.b16.cont [7/8] 0, 128
        %353 = vxpose.xlu0.c.b16.end [8/8] 0, 128
        %v354 = vpop.trf.xlu0
        %v355 = vpop.trf.xlu0
        %v356 = vpop.trf.xlu0
        %v357 = vpop.trf.xlu0
        %v358 = vpop.trf.xlu0
        %v359 = vpop.trf.xlu0
        %v360 = vpop.trf.xlu0
        %v361 = vpop.trf.xlu0
        %v363 = vrot.slane %v340, 4
        %vm364 = vcmask 64512
        %v366 = vsel %vm364, %v354, 0
        %v369 = vsel %vm364, %v355, 0
        %v372 = vsel %vm364, %v356, 0
        %v375 = vsel %vm364, %v357, 0
        %v378 = vsel %vm364, %v358, 0
        %v381 = vsel %vm364, %v359, 0
        %v384 = vsel %vm364, %v360, 0
        %v387 = vsel %vm364, %v361, 0
        %vm389 = vcmask 1043456
        %v391 = vsel %vm389, %v363, 0
        %393 = vmatprep.subr.bf16.mxu0 0
        %394 = vmatpush1.bf16.msra.mxu0 %v391
        %395 = vmatprep.subr.bf16.mxu0 0
        %396 = vmatpush1.bf16.msra.mxu0 0
        %397 = vmatprep.subr.bf16.mxu0 0
        %398 = vmatpush1.bf16.msra.mxu0 0
        %399 = vmatprep.subr.bf16.mxu0 0
        %400 = vmatpush1.bf16.msra.mxu0 0
        %401 = vmatprep.subr.bf16.mxu0 0
        %402 = vmatpush1.bf16.msra.mxu0 0
        %403 = vmatprep.subr.bf16.mxu0 0
        %404 = vmatpush1.bf16.msra.mxu0 0
        %405 = vmatprep.subr.bf16.mxu0 0
        %406 = vmatpush1.bf16.msra.mxu0 0
        %407 = vmatprep.subr.bf16.mxu0 0
        %408 = vmatpush1.bf16.msra.mxu0 0
        %409 = vmatprep.subr.bf16.mxu0 0
        %410 = vmatpush1.bf16.msra.mxu0 0
        %411 = vmatprep.subr.bf16.mxu0 0
        %412 = vmatpush1.bf16.msra.mxu0 0
        %413 = vmatprep.subr.bf16.mxu0 0
        %414 = vmatpush1.bf16.msra.mxu0 0
        %415 = vmatprep.subr.bf16.mxu0 0
        %416 = vmatpush1.bf16.msra.mxu0 0
        %417 = vmatprep.subr.bf16.mxu0 0
        %418 = vmatpush1.bf16.msra.mxu0 0
        %419 = vmatprep.subr.bf16.mxu0 0
        %420 = vmatpush1.bf16.msra.mxu0 0
        %421 = vmatprep.subr.bf16.mxu0 0
        %422 = vmatpush1.bf16.msra.mxu0 0
        %423 = vmatprep.subr.bf16.mxu0 0
        %424 = vmatpush1.bf16.msra.mxu0 0
        %425 = vmatprep.mubr.bf16.mxu0 0
        %426 = vmatmul.mubr.bf16.gmra.mrb[0].mxu0 %v366
        %v427 = vpop.f32.mrb[0].mxu0
        %v428 = vadd.f32 %v193, %v427
        %v429 = vpop.f32.mrb[0].mxu0
        %v430 = vpop.f32.mrb[0].mxu0
        %v431 = vadd.f32 %v193, %v430
        %v432 = vpop.f32.mrb[0].mxu0
        %433 = vmatprep.mubr.bf16.mxu0 0
        %434 = vmatmul.mubr.bf16.gmra.mrb[0].mxu0 %v369
        %v435 = vpop.f32.mrb[0].mxu0
        %v436 = vadd.f32 %v193, %v435
        %v437 = vpop.f32.mrb[0].mxu0
        %v438 = vpop.f32.mrb[0].mxu0
        %v439 = vadd.f32 %v193, %v438
        %v440 = vpop.f32.mrb[0].mxu0
        %441 = vmatprep.mubr.bf16.mxu0 0
        %442 = vmatmul.mubr.bf16.gmra.mrb[0].mxu0 %v372
        %v443 = vpop.f32.mrb[0].mxu0
        %v444 = vadd.f32 %v193, %v443
        %v445 = vpop.f32.mrb[0].mxu0
        %v446 = vpop.f32.mrb[0].mxu0
        %v447 = vadd.f32 %v193, %v446
        %v448 = vpop.f32.mrb[0].mxu0
        %449 = vmatprep.mubr.bf16.mxu0 0
        %450 = vmatmul.mubr.bf16.gmra.mrb[0].mxu0 %v375
        %v451 = vpop.f32.mrb[0].mxu0
        %v452 = vadd.f32 %v193, %v451
        %v453 = vpop.f32.mrb[0].mxu0
        %v454 = vpop.f32.mrb[0].mxu0
        %v455 = vadd.f32 %v193, %v454
        %v456 = vpop.f32.mrb[0].mxu0
        %457 = vmatprep.mubr.bf16.mxu0 0
        %458 = vmatmul.mubr.bf16.gmra.mrb[0].mxu0 %v378
        %v459 = vpop.f32.mrb[0].mxu0
        %v460 = vadd.f32 %v193, %v459
        %v461 = vpop.f32.mrb[0].mxu0
        %v462 = vpop.f32.mrb[0].mxu0
        %v463 = vadd.f32 %v193, %v462
        %v464 = vpop.f32.mrb[0].mxu0
        %465 = vmatprep.mubr.bf16.mxu0 0
        %466 = vmatmul.mubr.bf16.gmra.mrb[0].mxu0 %v381
        %v467 = vpop.f32.mrb[0].mxu0
        %v468 = vadd.f32 %v193, %v467
        %v469 = vpop.f32.mrb[0].mxu0
        %v470 = vpop.f32.mrb[0].mxu0
        %v471 = vadd.f32 %v193, %v470
        %v472 = vpop.f32.mrb[0].mxu0
        %473 = vmatprep.mubr.bf16.mxu0 0
        %474 = vmatmul.mubr.bf16.gmra.mrb[0].mxu0 %v384
        %v475 = vpop.f32.mrb[0].mxu0
        %v476 = vadd.f32 %v193, %v475
        %v477 = vpop.f32.mrb[0].mxu0
        %v478 = vpop.f32.mrb[0].mxu0
        %v479 = vadd.f32 %v193, %v478
        %v480 = vpop.f32.mrb[0].mxu0
        %481 = vmatprep.mubr.bf16.mxu0 0
        %482 = vmatmul.mubr.bf16.gmra.mrb[0].mxu0 %v387
        %v483 = vpop.f32.mrb[0].mxu0
        %v484 = vadd.f32 %v193, %v483
        %v485 = vpop.f32.mrb[0].mxu0
        %v486 = vpop.f32.mrb[0].mxu0
        %v487 = vadd.f32 %v193, %v486
        %v488 = vpop.f32.mrb[0].mxu0
        %489 = vdwg.mxu0
        %490 = vmax.xlane.f32.xlu0 %v428
        %v491 = vpop.xlane.xlu0 %490
        %492 = vmax.xlane.f32.xlu0 %v431
        %v493 = vpop.xlane.xlu0 %492
        %494 = vmax.xlane.f32.xlu0 %v436
        %v495 = vpop.xlane.xlu0 %494
        %496 = vmax.xlane.f32.xlu0 %v439
        %v497 = vpop.xlane.xlu0 %496
        %498 = vmax.xlane.f32.xlu0 %v444
        %v499 = vpop.xlane.xlu0 %498
        %500 = vmax.xlane.f32.xlu0 %v447
        %v501 = vpop.xlane.xlu0 %500
        %502 = vmax.xlane.f32.xlu0 %v452
        %v503 = vpop.xlane.xlu0 %502
        %504 = vmax.xlane.f32.xlu0 %v455
        %v505 = vpop.xlane.xlu0 %504
        %506 = vmax.xlane.f32.xlu0 %v460
        %v507 = vpop.xlane.xlu0 %506
        %508 = vmax.xlane.f32.xlu0 %v463
        %v509 = vpop.xlane.xlu0 %508
        %510 = vmax.xlane.f32.xlu0 %v468
        %v511 = vpop.xlane.xlu0 %510
        %512 = vmax.xlane.f32.xlu0 %v471
        %v513 = vpop.xlane.xlu0 %512
        %514 = vmax.xlane.f32.xlu0 %v476
        %v515 = vpop.xlane.xlu0 %514
        %516 = vmax.xlane.f32.xlu0 %v479
        %v517 = vpop.xlane.xlu0 %516
        %518 = vmax.xlane.f32.xlu0 %v484
        %v519 = vpop.xlane.xlu0 %518
        %520 = vmax.xlane.f32.xlu0 %v487
        %v521 = vpop.xlane.xlu0 %520
        %v522 = vsub.f32 %v428, %v491
        %v523 = vsub.f32 %v431, %v493
        %v524 = vsub.f32 %v436, %v495
        %v525 = vsub.f32 %v439, %v497
        %v526 = vsub.f32 %v444, %v499
        %v527 = vsub.f32 %v447, %v501
        %v528 = vsub.f32 %v452, %v503
        %v529 = vsub.f32 %v455, %v505
        %v530 = vsub.f32 %v460, %v507
        %v531 = vsub.f32 %v463, %v509
        %v532 = vsub.f32 %v468, %v511
        %v533 = vsub.f32 %v471, %v513
        %v534 = vsub.f32 %v476, %v515
        %v535 = vsub.f32 %v479, %v517
        %v536 = vsub.f32 %v484, %v519
        %v537 = vsub.f32 %v487, %v521
        %v538 = vmul.f32 %v522, 1.442695
        %v539 = vpow.pop %v538
        %v540 = vmul.f32 %v523, 1.442695
        %v541 = vpow.pop %v540
        %v542 = vmul.f32 %v524, 1.442695
        %v543 = vpow.pop %v542
        %v544 = vmul.f32 %v525, 1.442695
        %v545 = vpow.pop %v544
        %v546 = vmul.f32 %v526, 1.442695
        %v547 = vpow.pop %v546
        %v548 = vmul.f32 %v527, 1.442695
        %v549 = vpow.pop %v548
        %v550 = vmul.f32 %v528, 1.442695
        %v551 = vpow.pop %v550
        %v552 = vmul.f32 %v529, 1.442695
        %v553 = vpow.pop %v552
        %v554 = vmul.f32 %v530, 1.442695
        %v555 = vpow.pop %v554
        %v556 = vmul.f32 %v531, 1.442695
        %v557 = vpow.pop %v556
        %v558 = vmul.f32 %v532, 1.442695
        %v559 = vpow.pop %v558
        %v560 = vmul.f32 %v533, 1.442695
        %v561 = vpow.pop %v560
        %v562 = vmul.f32 %v534, 1.442695
        %v563 = vpow.pop %v562
        %v564 = vmul.f32 %v535, 1.442695
        %v565 = vpow.pop %v564
        %v566 = vmul.f32 %v536, 1.442695
        %v567 = vpow.pop %v566
        %v568 = vmul.f32 %v537, 1.442695
        %v569 = vpow.pop %v568
        %570 = vadd.xlane.f32.xlu0 %v539
        %v571 = vpop.xlane.xlu0 %570
        %572 = vadd.xlane.f32.xlu0 %v541
        %v573 = vpop.xlane.xlu0 %572
        %574 = vadd.xlane.f32.xlu0 %v543
        %v575 = vpop.xlane.xlu0 %574
        %576 = vadd.xlane.f32.xlu0 %v545
        %v577 = vpop.xlane.xlu0 %576
        %578 = vadd.xlane.f32.xlu0 %v547
        %v579 = vpop.xlane.xlu0 %578
        %580 = vadd.xlane.f32.xlu0 %v549
        %v581 = vpop.xlane.xlu0 %580
        %582 = vadd.xlane.f32.xlu0 %v551
        %v583 = vpop.xlane.xlu0 %582
        %584 = vadd.xlane.f32.xlu0 %v553
        %v585 = vpop.xlane.xlu0 %584
        %586 = vadd.xlane.f32.xlu0 %v555
        %v587 = vpop.xlane.xlu0 %586
        %588 = vadd.xlane.f32.xlu0 %v557
        %v589 = vpop.xlane.xlu0 %588
        %590 = vadd.xlane.f32.xlu0 %v559
        %v591 = vpop.xlane.xlu0 %590
        %592 = vadd.xlane.f32.xlu0 %v561
        %v593 = vpop.xlane.xlu0 %592
        %594 = vadd.xlane.f32.xlu0 %v563
        %v595 = vpop.xlane.xlu0 %594
        %596 = vadd.xlane.f32.xlu0 %v565
        %v597 = vpop.xlane.xlu0 %596
        %598 = vadd.xlane.f32.xlu0 %v567
        %v599 = vpop.xlane.xlu0 %598
        %600 = vadd.xlane.f32.xlu0 %v569
        %v601 = vpop.xlane.xlu0 %600
        %v602 = vrcp.pop %v571
        %v603 = vrcp.pop %v573
        %v604 = vrcp.pop %v575
        %v605 = vrcp.pop %v577
        %v606 = vrcp.pop %v579
        %v607 = vrcp.pop %v581
        %v608 = vrcp.pop %v583
        %v609 = vrcp.pop %v585
        %v610 = vrcp.pop %v587
        %v611 = vrcp.pop %v589
        %v612 = vrcp.pop %v591
        %v613 = vrcp.pop %v593
        %v614 = vrcp.pop %v595
        %v615 = vrcp.pop %v597
        %v616 = vrcp.pop %v599
        %v617 = vrcp.pop %v601
        %v618 = vmul.f32 %v539, %v602
        %v619 = vmul.f32 %v541, %v603
        %v620 = vmul.f32 %v543, %v604
        %v621 = vmul.f32 %v545, %v605
        %v622 = vmul.f32 %v547, %v606
        %v623 = vmul.f32 %v549, %v607
        %v624 = vmul.f32 %v551, %v608
        %v625 = vmul.f32 %v553, %v609
        %v626 = vmul.f32 %v555, %v610
        %v627 = vmul.f32 %v557, %v611
        %v628 = vmul.f32 %v559, %v612
        %v629 = vmul.f32 %v561, %v613
        %v630 = vmul.f32 %v563, %v614
        %v631 = vmul.f32 %v565, %v615
        %v632 = vmul.f32 %v567, %v616
        %v633 = vmul.f32 %v569, %v617
        %v634 = vpack.c.bf16 %v619, %v618
        %v635 = vpack.c.bf16 %v621, %v620
        %v636 = vpack.c.bf16 %v623, %v622
        %v637 = vpack.c.bf16 %v625, %v624
        %v638 = vpack.c.bf16 %v627, %v626
        %v639 = vpack.c.bf16 %v629, %v628
        %v640 = vpack.c.bf16 %v631, %v630
        %v641 = vpack.c.bf16 %v633, %v632
        %642 = vmatprep.subr.bf16.mxu0 0
        %643 = vmatpush1.bf16.xpose.msra.mxu0 %v634
        %644 = vmatprep.subr.bf16.mxu0 0
        %645 = vmatpush1.bf16.xpose.msra.mxu0 %v635
        %646 = vmatprep.subr.bf16.mxu0 0
        %647 = vmatpush1.bf16.xpose.msra.mxu0 %v636
        %648 = vmatprep.subr.bf16.mxu0 0
        %649 = vmatpush1.bf16.xpose.msra.mxu0 %v637
        %650 = vmatprep.subr.bf16.mxu0 0
        %651 = vmatpush1.bf16.xpose.msra.mxu0 %v638
        %652 = vmatprep.subr.bf16.mxu0 0
        %653 = vmatpush1.bf16.xpose.msra.mxu0 %v639
        %654 = vmatprep.subr.bf16.mxu0 0
        %655 = vmatpush1.bf16.xpose.msra.mxu0 %v640
        %656 = vmatprep.subr.bf16.mxu0 0
        %657 = vmatpush1.bf16.xpose.msra.mxu0 %v641
        %658 = vmatprep.subr.bf16.mxu0 0
        %659 = vmatpush1.bf16.xpose.msra.mxu0 0
        %660 = vmatprep.subr.bf16.mxu0 0
        %661 = vmatpush1.bf16.xpose.msra.mxu0 0
        %662 = vmatprep.subr.bf16.mxu0 0
        %663 = vmatpush1.bf16.xpose.msra.mxu0 0
        %664 = vmatprep.subr.bf16.mxu0 0
        %665 = vmatpush1.bf16.xpose.msra.mxu0 0
        %666 = vmatprep.subr.bf16.mxu0 0
        %667 = vmatpush1.bf16.xpose.msra.mxu0 0
        %668 = vmatprep.subr.bf16.mxu0 0
        %669 = vmatpush1.bf16.xpose.msra.mxu0 0
        %670 = vmatprep.subr.bf16.mxu0 0
        %671 = vmatpush1.bf16.xpose.msra.mxu0 0
        %672 = vmatprep.subr.bf16.mxu0 0
        %673 = vmatpush1.bf16.xpose.msra.mxu0 0
        %674 = vmatprep.mubr.bf16.mxu0 0
        %675 = vmatmul.mubr.bf16.gmra.mrb[0].mxu0 %v341
        %v676 = vpop.f32.mrb[0].mxu0
        %v677 = vadd.f32 0.0, %v676
        %v678 = vpop.f32.mrb[0].mxu0
        %v679 = vpop.f32.mrb[0].mxu0
        %v680 = vpop.f32.mrb[0].mxu0
        %681 = vdwg.mxu0
        %682 = vst [vmem:[%s176] sm:$0xff] %v677
        %v684 = vrot.slane %v341, 4
        %686 = vxpose.xlu0.c.b16.start [1/8] %v684, 128
        %687 = vxpose.xlu0.c.b16.cont [2/8] 0, 128
        %688 = vxpose.xlu0.c.b16.cont [3/8] 0, 128
        %689 = vxpose.xlu0.c.b16.cont [4/8] 0, 128
        %690 = vxpose.xlu0.c.b16.cont [5/8] 0, 128
        %691 = vxpose.xlu0.c.b16.cont [6/8] 0, 128
        %692 = vxpose.xlu0.c.b16.cont [7/8] 0, 128
        %693 = vxpose.xlu0.c.b16.end [8/8] 0, 128
        %v694 = vpop.trf.xlu0
        %v695 = vpop.trf.xlu0
        %v696 = vpop.trf.xlu0
        %v697 = vpop.trf.xlu0
        %v698 = vpop.trf.xlu0
        %v699 = vpop.trf.xlu0
        %v700 = vpop.trf.xlu0
        %v701 = vpop.trf.xlu0
        %v703 = vsel %vm364, %v694, 0
        %v706 = vsel %vm364, %v695, 0
        %v709 = vsel %vm364, %v696, 0
        %v712 = vsel %vm364, %v697, 0
        %v715 = vsel %vm364, %v698, 0
        %v718 = vsel %vm364, %v699, 0
        %v721 = vsel %vm364, %v700, 0
        %v724 = vsel %vm364, %v701, 0
        %v727 = vsel %vm389, %v342, 0
        %729 = vmatprep.subr.bf16.mxu0 0
        %730 = vmatpush1.bf16.msra.mxu0 %v727
        %731 = vmatprep.subr.bf16.mxu0 0
        %732 = vmatpush1.bf16.msra.mxu0 0
        %733 = vmatprep.subr.bf16.mxu0 0
        %734 = vmatpush1.bf16.msra.mxu0 0
        %735 = vmatprep.subr.bf16.mxu0 0
        %736 = vmatpush1.bf16.msra.mxu0 0
        %737 = vmatprep.subr.bf16.mxu0 0
        %738 = vmatpush1.bf16.msra.mxu0 0
        %739 = vmatprep.subr.bf16.mxu0 0
        %740 = vmatpush1.bf16.msra.mxu0 0
        %741 = vmatprep.subr.bf16.mxu0 0
        %742 = vmatpush1.bf16.msra.mxu0 0
        %743 = vmatprep.subr.bf16.mxu0 0
        %744 = vmatpush1.bf16.msra.mxu0 0
        %745 = vmatprep.subr.bf16.mxu0 0
        %746 = vmatpush1.bf16.msra.mxu0 0
        %747 = vmatprep.subr.bf16.mxu0 0
        %748 = vmatpush1.bf16.msra.mxu0 0
        %749 = vmatprep.subr.bf16.mxu0 0
        %750 = vmatpush1.bf16.msra.mxu0 0
        %751 = vmatprep.subr.bf16.mxu0 0
        %752 = vmatpush1.bf16.msra.mxu0 0
        %753 = vmatprep.subr.bf16.mxu0 0
        %754 = vmatpush1.bf16.msra.mxu0 0
        %755 = vmatprep.subr.bf16.mxu0 0
        %756 = vmatpush1.bf16.msra.mxu0 0
        %757 = vmatprep.subr.bf16.mxu0 0
        %758 = vmatpush1.bf16.msra.mxu0 0
        %759 = vmatprep.subr.bf16.mxu0 0
        %760 = vmatpush1.bf16.msra.mxu0 0
        %761 = vmatprep.mubr.bf16.mxu0 0
        %762 = vmatmul.mubr.bf16.gmra.mrb[0].mxu0 %v703
        %v763 = vpop.f32.mrb[0].mxu0
        %v764 = vadd.f32 %v193, %v763
        %v765 = vpop.f32.mrb[0].mxu0
        %v766 = vpop.f32.mrb[0].mxu0
        %v767 = vadd.f32 %v193, %v766
        %v768 = vpop.f32.mrb[0].mxu0
        %769 = vmatprep.mubr.bf16.mxu0 0
        %770 = vmatmul.mubr.bf16.gmra.mrb[0].mxu0 %v706
        %v771 = vpop.f32.mrb[0].mxu0
        %v772 = vadd.f32 %v193, %v771
        %v773 = vpop.f32.mrb[0].mxu0
        %v774 = vpop.f32.mrb[0].mxu0
        %v775 = vadd.f32 %v193, %v774
        %v776 = vpop.f32.mrb[0].mxu0
        %777 = vmatprep.mubr.bf16.mxu0 0
        %778 = vmatmul.mubr.bf16.gmra.mrb[0].mxu0 %v709
        %v779 = vpop.f32.mrb[0].mxu0
        %v780 = vadd.f32 %v193, %v779
        %v781 = vpop.f32.mrb[0].mxu0
        %v782 = vpop.f32.mrb[0].mxu0
        %v783 = vadd.f32 %v193, %v782
        %v784 = vpop.f32.mrb[0].mxu0
        %785 = vmatprep.mubr.bf16.mxu0 0
        %786 = vmatmul.mubr.bf16.gmra.mrb[0].mxu0 %v712
        %v787 = vpop.f32.mrb[0].mxu0
        %v788 = vadd.f32 %v193, %v787
        %v789 = vpop.f32.mrb[0].mxu0
        %v790 = vpop.f32.mrb[0].mxu0
        %v791 = vadd.f32 %v193, %v790
        %v792 = vpop.f32.mrb[0].mxu0
        %793 = vmatprep.mubr.bf16.mxu0 0
        %794 = vmatmul.mubr.bf16.gmra.mrb[0].mxu0 %v715
        %v795 = vpop.f32.mrb[0].mxu0
        %v796 = vadd.f32 %v193, %v795
        %v797 = vpop.f32.mrb[0].mxu0
        %v798 = vpop.f32.mrb[0].mxu0
        %v799 = vadd.f32 %v193, %v798
        %v800 = vpop.f32.mrb[0].mxu0
        %801 = vmatprep.mubr.bf16.mxu0 0
        %802 = vmatmul.mubr.bf16.gmra.mrb[0].mxu0 %v718
        %v803 = vpop.f32.mrb[0].mxu0
        %v804 = vadd.f32 %v193, %v803
        %v805 = vpop.f32.mrb[0].mxu0
        %v806 = vpop.f32.mrb[0].mxu0
        %v807 = vadd.f32 %v193, %v806
        %v808 = vpop.f32.mrb[0].mxu0
        %809 = vmatprep.mubr.bf16.mxu0 0
        %810 = vmatmul.mubr.bf16.gmra.mrb[0].mxu0 %v721
        %v811 = vpop.f32.mrb[0].mxu0
        %v812 = vadd.f32 %v193, %v811
        %v813 = vpop.f32.mrb[0].mxu0
        %v814 = vpop.f32.mrb[0].mxu0
        %v815 = vadd.f32 %v193, %v814
        %v816 = vpop.f32.mrb[0].mxu0
        %817 = vmatprep.mubr.bf16.mxu0 0
        %818 = vmatmul.mubr.bf16.gmra.mrb[0].mxu0 %v724
        %v819 = vpop.f32.mrb[0].mxu0
        %v820 = vadd.f32 %v193, %v819
        %v821 = vpop.f32.mrb[0].mxu0
        %v822 = vpop.f32.mrb[0].mxu0
        %v823 = vadd.f32 %v193, %v822
        %v824 = vpop.f32.mrb[0].mxu0
        %825 = vdwg.mxu0
        %826 = vmax.xlane.f32.xlu0 %v764
        %v827 = vpop.xlane.xlu0 %826
        %828 = vmax.xlane.f32.xlu0 %v767
        %v829 = vpop.xlane.xlu0 %828
        %830 = vmax.xlane.f32.xlu0 %v772
        %v831 = vpop.xlane.xlu0 %830
        %832 = vmax.xlane.f32.xlu0 %v775
        %v833 = vpop.xlane.xlu0 %832
        %834 = vmax.xlane.f32.xlu0 %v780
        %v835 = vpop.xlane.xlu0 %834
        %836 = vmax.xlane.f32.xlu0 %v783
        %v837 = vpop.xlane.xlu0 %836
        %838 = vmax.xlane.f32.xlu0 %v788
        %v839 = vpop.xlane.xlu0 %838
        %840 = vmax.xlane.f32.xlu0 %v791
        %v841 = vpop.xlane.xlu0 %840
        %842 = vmax.xlane.f32.xlu0 %v796
        %v843 = vpop.xlane.xlu0 %842
        %844 = vmax.xlane.f32.xlu0 %v799
        %v845 = vpop.xlane.xlu0 %844
        %846 = vmax.xlane.f32.xlu0 %v804
        %v847 = vpop.xlane.xlu0 %846
        %848 = vmax.xlane.f32.xlu0 %v807
        %v849 = vpop.xlane.xlu0 %848
        %850 = vmax.xlane.f32.xlu0 %v812
        %v851 = vpop.xlane.xlu0 %850
        %852 = vmax.xlane.f32.xlu0 %v815
        %v853 = vpop.xlane.xlu0 %852
        %854 = vmax.xlane.f32.xlu0 %v820
        %v855 = vpop.xlane.xlu0 %854
        %856 = vmax.xlane.f32.xlu0 %v823
        %v857 = vpop.xlane.xlu0 %856
        %v858 = vsub.f32 %v764, %v827
        %v859 = vsub.f32 %v767, %v829
        %v860 = vsub.f32 %v772, %v831
        %v861 = vsub.f32 %v775, %v833
        %v862 = vsub.f32 %v780, %v835
        %v863 = vsub.f32 %v783, %v837
        %v864 = vsub.f32 %v788, %v839
        %v865 = vsub.f32 %v791, %v841
        %v866 = vsub.f32 %v796, %v843
        %v867 = vsub.f32 %v799, %v845
        %v868 = vsub.f32 %v804, %v847
        %v869 = vsub.f32 %v807, %v849
        %v870 = vsub.f32 %v812, %v851
        %v871 = vsub.f32 %v815, %v853
        %v872 = vsub.f32 %v820, %v855
        %v873 = vsub.f32 %v823, %v857
        %v874 = vmul.f32 %v858, 1.442695
        %v875 = vpow.pop %v874
        %v876 = vmul.f32 %v859, 1.442695
        %v877 = vpow.pop %v876
        %v878 = vmul.f32 %v860, 1.442695
        %v879 = vpow.pop %v878
        %v880 = vmul.f32 %v861, 1.442695
        %v881 = vpow.pop %v880
        %v882 = vmul.f32 %v862, 1.442695
        %v883 = vpow.pop %v882
        %v884 = vmul.f32 %v863, 1.442695
        %v885 = vpow.pop %v884
        %v886 = vmul.f32 %v864, 1.442695
        %v887 = vpow.pop %v886
        %v888 = vmul.f32 %v865, 1.442695
        %v889 = vpow.pop %v888
        %v890 = vmul.f32 %v866, 1.442695
        %v891 = vpow.pop %v890
        %v892 = vmul.f32 %v867, 1.442695
        %v893 = vpow.pop %v892
        %v894 = vmul.f32 %v868, 1.442695
        %v895 = vpow.pop %v894
        %v896 = vmul.f32 %v869, 1.442695
        %v897 = vpow.pop %v896
        %v898 = vmul.f32 %v870, 1.442695
        %v899 = vpow.pop %v898
        %v900 = vmul.f32 %v871, 1.442695
        %v901 = vpow.pop %v900
        %v902 = vmul.f32 %v872, 1.442695
        %v903 = vpow.pop %v902
        %v904 = vmul.f32 %v873, 1.442695
        %v905 = vpow.pop %v904
        %906 = vadd.xlane.f32.xlu0 %v875
        %v907 = vpop.xlane.xlu0 %906
        %908 = vadd.xlane.f32.xlu0 %v877
        %v909 = vpop.xlane.xlu0 %908
        %910 = vadd.xlane.f32.xlu0 %v879
        %v911 = vpop.xlane.xlu0 %910
        %912 = vadd.xlane.f32.xlu0 %v881
        %v913 = vpop.xlane.xlu0 %912
        %914 = vadd.xlane.f32.xlu0 %v883
        %v915 = vpop.xlane.xlu0 %914
        %916 = vadd.xlane.f32.xlu0 %v885
        %v917 = vpop.xlane.xlu0 %916
        %918 = vadd.xlane.f32.xlu0 %v887
        %v919 = vpop.xlane.xlu0 %918
        %920 = vadd.xlane.f32.xlu0 %v889
        %v921 = vpop.xlane.xlu0 %920
        %922 = vadd.xlane.f32.xlu0 %v891
        %v923 = vpop.xlane.xlu0 %922
        %924 = vadd.xlane.f32.xlu0 %v893
        %v925 = vpop.xlane.xlu0 %924
        %926 = vadd.xlane.f32.xlu0 %v895
        %v927 = vpop.xlane.xlu0 %926
        %928 = vadd.xlane.f32.xlu0 %v897
        %v929 = vpop.xlane.xlu0 %928
        %930 = vadd.xlane.f32.xlu0 %v899
        %v931 = vpop.xlane.xlu0 %930
        %932 = vadd.xlane.f32.xlu0 %v901
        %v933 = vpop.xlane.xlu0 %932
        %934 = vadd.xlane.f32.xlu0 %v903
        %v935 = vpop.xlane.xlu0 %934
        %936 = vadd.xlane.f32.xlu0 %v905
        %v937 = vpop.xlane.xlu0 %936
        %v938 = vrcp.pop %v907
        %v939 = vrcp.pop %v909
        %v940 = vrcp.pop %v911
        %v941 = vrcp.pop %v913
        %v942 = vrcp.pop %v915
        %v943 = vrcp.pop %v917
        %v944 = vrcp.pop %v919
        %v945 = vrcp.pop %v921
        %v946 = vrcp.pop %v923
        %v947 = vrcp.pop %v925
        %v948 = vrcp.pop %v927
        %v949 = vrcp.pop %v929
        %v950 = vrcp.pop %v931
        %v951 = vrcp.pop %v933
        %v952 = vrcp.pop %v935
        %v953 = vrcp.pop %v937
        %v954 = vmul.f32 %v875, %v938
        %v955 = vmul.f32 %v877, %v939
        %v956 = vmul.f32 %v879, %v940
        %v957 = vmul.f32 %v881, %v941
        %v958 = vmul.f32 %v883, %v942
        %v959 = vmul.f32 %v885, %v943
        %v960 = vmul.f32 %v887, %v944
        %v961 = vmul.f32 %v889, %v945
        %v962 = vmul.f32 %v891, %v946
        %v963 = vmul.f32 %v893, %v947
        %v964 = vmul.f32 %v895, %v948
        %v965 = vmul.f32 %v897, %v949
        %v966 = vmul.f32 %v899, %v950
        %v967 = vmul.f32 %v901, %v951
        %v968 = vmul.f32 %v903, %v952
        %v969 = vmul.f32 %v905, %v953
        %v970 = vpack.c.bf16 %v955, %v954
        %v971 = vpack.c.bf16 %v957, %v956
        %v972 = vpack.c.bf16 %v959, %v958
        %v973 = vpack.c.bf16 %v961, %v960
        %v974 = vpack.c.bf16 %v963, %v962
        %v975 = vpack.c.bf16 %v965, %v964
        %v976 = vpack.c.bf16 %v967, %v966
        %v977 = vpack.c.bf16 %v969, %v968
        %v979 = vrot.slane %v342, 4
        %981 = vmatprep.subr.bf16.mxu0 0
        %982 = vmatpush1.bf16.xpose.msra.mxu0 %v970
        %983 = vmatprep.subr.bf16.mxu0 0
        %984 = vmatpush1.bf16.xpose.msra.mxu0 %v971
        %985 = vmatprep.subr.bf16.mxu0 0
        %986 = vmatpush1.bf16.xpose.msra.mxu0 %v972
        %987 = vmatprep.subr.bf16.mxu0 0
        %988 = vmatpush1.bf16.xpose.msra.mxu0 %v973
        %989 = vmatprep.subr.bf16.mxu0 0
        %990 = vmatpush1.bf16.xpose.msra.mxu0 %v974
        %991 = vmatprep.subr.bf16.mxu0 0
        %992 = vmatpush1.bf16.xpose.msra.mxu0 %v975
        %993 = vmatprep.subr.bf16.mxu0 0
        %994 = vmatpush1.bf16.xpose.msra.mxu0 %v976
        %995 = vmatprep.subr.bf16.mxu0 0
        %996 = vmatpush1.bf16.xpose.msra.mxu0 %v977
        %997 = vmatprep.subr.bf16.mxu0 0
        %998 = vmatpush1.bf16.xpose.msra.mxu0 0
        %999 = vmatprep.subr.bf16.mxu0 0
        %1000 = vmatpush1.bf16.xpose.msra.mxu0 0
        %1001 = vmatprep.subr.bf16.mxu0 0
        %1002 = vmatpush1.bf16.xpose.msra.mxu0 0
        %1003 = vmatprep.subr.bf16.mxu0 0
        %1004 = vmatpush1.bf16.xpose.msra.mxu0 0
        %1005 = vmatprep.subr.bf16.mxu0 0
        %1006 = vmatpush1.bf16.xpose.msra.mxu0 0
        %1007 = vmatprep.subr.bf16.mxu0 0
        %1008 = vmatpush1.bf16.xpose.msra.mxu0 0
        %1009 = vmatprep.subr.bf16.mxu0 0
        %1010 = vmatpush1.bf16.xpose.msra.mxu0 0
        %1011 = vmatprep.subr.bf16.mxu0 0
        %1012 = vmatpush1.bf16.xpose.msra.mxu0 0
        %1013 = vmatprep.mubr.bf16.mxu0 0
        %1014 = vmatmul.mubr.bf16.gmra.mrb[0].mxu0 %v979
        %v1015 = vpop.f32.mrb[0].mxu0
        %v1016 = vadd.f32 0.0, %v1015
        %v1017 = vpop.f32.mrb[0].mxu0
        %v1018 = vpop.f32.mrb[0].mxu0
        %v1019 = vpop.f32.mrb[0].mxu0
        %1020 = vdwg.mxu0
        %1021 = vst [vmem:[%s176 + $0x8] sm:$0xff] %v1016
        %1022 = vxpose.xlu0.c.b16.start [1/8] %v343, 128
        %1023 = vxpose.xlu0.c.b16.cont [2/8] 0, 128
        %1024 = vxpose.xlu0.c.b16.cont [3/8] 0, 128
        %1025 = vxpose.xlu0.c.b16.cont [4/8] 0, 128
        %1026 = vxpose.xlu0.c.b16.cont [5/8] 0, 128
        %1027 = vxpose.xlu0.c.b16.cont [6/8] 0, 128
        %1028 = vxpose.xlu0.c.b16.cont [7/8] 0, 128
        %1029 = vxpose.xlu0.c.b16.end [8/8] 0, 128
        %v1030 = vpop.trf.xlu0
        %v1031 = vpop.trf.xlu0
        %v1032 = vpop.trf.xlu0
        %v1033 = vpop.trf.xlu0
        %v1034 = vpop.trf.xlu0
        %v1035 = vpop.trf.xlu0
        %v1036 = vpop.trf.xlu0
        %v1037 = vpop.trf.xlu0
        %v1039 = vrot.slane %v343, 4
        %v1041 = vsel %vm364, %v1030, 0
        %v1044 = vsel %vm364, %v1031, 0
        %v1047 = vsel %vm364, %v1032, 0
        %v1050 = vsel %vm364, %v1033, 0
        %v1053 = vsel %vm364, %v1034, 0
        %v1056 = vsel %vm364, %v1035, 0
        %v1059 = vsel %vm364, %v1036, 0
        %v1062 = vsel %vm364, %v1037, 0
        %v1065 = vsel %vm389, %v1039, 0
        %1067 = vmatprep.subr.bf16.mxu0 0
        %1068 = vmatpush1.bf16.msra.mxu0 %v1065
        %1069 = vmatprep.subr.bf16.mxu0 0
        %1070 = vmatpush1.bf16.msra.mxu0 0
        %1071 = vmatprep.subr.bf16.mxu0 0
        %1072 = vmatpush1.bf16.msra.mxu0 0
        %1073 = vmatprep.subr.bf16.mxu0 0
        %1074 = vmatpush1.bf16.msra.mxu0 0
        %1075 = vmatprep.subr.bf16.mxu0 0
        %1076 = vmatpush1.bf16.msra.mxu0 0
        %1077 = vmatprep.subr.bf16.mxu0 0
        %1078 = vmatpush1.bf16.msra.mxu0 0
        %1079 = vmatprep.subr.bf16.mxu0 0
        %1080 = vmatpush1.bf16.msra.mxu0 0
        %1081 = vmatprep.subr.bf16.mxu0 0
        %1082 = vmatpush1.bf16.msra.mxu0 0
        %1083 = vmatprep.subr.bf16.mxu0 0
        %1084 = vmatpush1.bf16.msra.mxu0 0
        %1085 = vmatprep.subr.bf16.mxu0 0
        %1086 = vmatpush1.bf16.msra.mxu0 0
        %1087 = vmatprep.subr.bf16.mxu0 0
        %1088 = vmatpush1.bf16.msra.mxu0 0
        %1089 = vmatprep.subr.bf16.mxu0 0
        %1090 = vmatpush1.bf16.msra.mxu0 0
        %1091 = vmatprep.subr.bf16.mxu0 0
        %1092 = vmatpush1.bf16.msra.mxu0 0
        %1093 = vmatprep.subr.bf16.mxu0 0
        %1094 = vmatpush1.bf16.msra.mxu0 0
        %1095 = vmatprep.subr.bf16.mxu0 0
        %1096 = vmatpush1.bf16.msra.mxu0 0
        %1097 = vmatprep.subr.bf16.mxu0 0
        %1098 = vmatpush1.bf16.msra.mxu0 0
        %1099 = vmatprep.mubr.bf16.mxu0 0
        %1100 = vmatmul.mubr.bf16.gmra.mrb[0].mxu0 %v1041
        %v1101 = vpop.f32.mrb[0].mxu0
        %v1102 = vadd.f32 %v193, %v1101
        %v1103 = vpop.f32.mrb[0].mxu0
        %v1104 = vpop.f32.mrb[0].mxu0
        %v1105 = vadd.f32 %v193, %v1104
        %v1106 = vpop.f32.mrb[0].mxu0
        %1107 = vmatprep.mubr.bf16.mxu0 0
        %1108 = vmatmul.mubr.bf16.gmra.mrb[0].mxu0 %v1044
        %v1109 = vpop.f32.mrb[0].mxu0
        %v1110 = vadd.f32 %v193, %v1109
        %v1111 = vpop.f32.mrb[0].mxu0
        %v1112 = vpop.f32.mrb[0].mxu0
        %v1113 = vadd.f32 %v193, %v1112
        %v1114 = vpop.f32.mrb[0].mxu0
        %1115 = vmatprep.mubr.bf16.mxu0 0
        %1116 = vmatmul.mubr.bf16.gmra.mrb[0].mxu0 %v1047
        %v1117 = vpop.f32.mrb[0].mxu0
        %v1118 = vadd.f32 %v193, %v1117
        %v1119 = vpop.f32.mrb[0].mxu0
        %v1120 = vpop.f32.mrb[0].mxu0
        %v1121 = vadd.f32 %v193, %v1120
        %v1122 = vpop.f32.mrb[0].mxu0
        %1123 = vmatprep.mubr.bf16.mxu0 0
        %1124 = vmatmul.mubr.bf16.gmra.mrb[0].mxu0 %v1050
        %v1125 = vpop.f32.mrb[0].mxu0
        %v1126 = vadd.f32 %v193, %v1125
        %v1127 = vpop.f32.mrb[0].mxu0
        %v1128 = vpop.f32.mrb[0].mxu0
        %v1129 = vadd.f32 %v193, %v1128
        %v1130 = vpop.f32.mrb[0].mxu0
        %1131 = vmatprep.mubr.bf16.mxu0 0
        %1132 = vmatmul.mubr.bf16.gmra.mrb[0].mxu0 %v1053
        %v1133 = vpop.f32.mrb[0].mxu0
        %v1134 = vadd.f32 %v193, %v1133
        %v1135 = vpop.f32.mrb[0].mxu0
        %v1136 = vpop.f32.mrb[0].mxu0
        %v1137 = vadd.f32 %v193, %v1136
        %v1138 = vpop.f32.mrb[0].mxu0
        %1139 = vmatprep.mubr.bf16.mxu0 0
        %1140 = vmatmul.mubr.bf16.gmra.mrb[0].mxu0 %v1056
        %v1141 = vpop.f32.mrb[0].mxu0
        %v1142 = vadd.f32 %v193, %v1141
        %v1143 = vpop.f32.mrb[0].mxu0
        %v1144 = vpop.f32.mrb[0].mxu0
        %v1145 = vadd.f32 %v193, %v1144
        %v1146 = vpop.f32.mrb[0].mxu0
        %1147 = vmatprep.mubr.bf16.mxu0 0
        %1148 = vmatmul.mubr.bf16.gmra.mrb[0].mxu0 %v1059
        %v1149 = vpop.f32.mrb[0].mxu0
        %v1150 = vadd.f32 %v193, %v1149
        %v1151 = vpop.f32.mrb[0].mxu0
        %v1152 = vpop.f32.mrb[0].mxu0
        %v1153 = vadd.f32 %v193, %v1152
        %v1154 = vpop.f32.mrb[0].mxu0
        %1155 = vmatprep.mubr.bf16.mxu0 0
        %1156 = vmatmul.mubr.bf16.gmra.mrb[0].mxu0 %v1062
        %v1157 = vpop.f32.mrb[0].mxu0
        %v1158 = vadd.f32 %v193, %v1157
        %v1159 = vpop.f32.mrb[0].mxu0
        %v1160 = vpop.f32.mrb[0].mxu0
        %v1161 = vadd.f32 %v193, %v1160
        %v1162 = vpop.f32.mrb[0].mxu0
        %1163 = vdwg.mxu0
        %1164 = vmax.xlane.f32.xlu0 %v1102
        %v1165 = vpop.xlane.xlu0 %1164
        %1166 = vmax.xlane.f32.xlu0 %v1105
        %v1167 = vpop.xlane.xlu0 %1166
        %1168 = vmax.xlane.f32.xlu0 %v1110
        %v1169 = vpop.xlane.xlu0 %1168
        %1170 = vmax.xlane.f32.xlu0 %v1113
        %v1171 = vpop.xlane.xlu0 %1170
        %1172 = vmax.xlane.f32.xlu0 %v1118
        %v1173 = vpop.xlane.xlu0 %1172
        %1174 = vmax.xlane.f32.xlu0 %v1121
        %v1175 = vpop.xlane.xlu0 %1174
        %1176 = vmax.xlane.f32.xlu0 %v1126
        %v1177 = vpop.xlane.xlu0 %1176
        %1178 = vmax.xlane.f32.xlu0 %v1129
        %v1179 = vpop.xlane.xlu0 %1178
        %1180 = vmax.xlane.f32.xlu0 %v1134
        %v1181 = vpop.xlane.xlu0 %1180
        %1182 = vmax.xlane.f32.xlu0 %v1137
        %v1183 = vpop.xlane.xlu0 %1182
        %1184 = vmax.xlane.f32.xlu0 %v1142
        %v1185 = vpop.xlane.xlu0 %1184
        %1186 = vmax.xlane.f32.xlu0 %v1145
        %v1187 = vpop.xlane.xlu0 %1186
        %1188 = vmax.xlane.f32.xlu0 %v1150
        %v1189 = vpop.xlane.xlu0 %1188
        %1190 = vmax.xlane.f32.xlu0 %v1153
        %v1191 = vpop.xlane.xlu0 %1190
        %1192 = vmax.xlane.f32.xlu0 %v1158
        %v1193 = vpop.xlane.xlu0 %1192
        %1194 = vmax.xlane.f32.xlu0 %v1161
        %v1195 = vpop.xlane.xlu0 %1194
        %v1196 = vsub.f32 %v1102, %v1165
        %v1197 = vsub.f32 %v1105, %v1167
        %v1198 = vsub.f32 %v1110, %v1169
        %v1199 = vsub.f32 %v1113, %v1171
        %v1200 = vsub.f32 %v1118, %v1173
        %v1201 = vsub.f32 %v1121, %v1175
        %v1202 = vsub.f32 %v1126, %v1177
        %v1203 = vsub.f32 %v1129, %v1179
        %v1204 = vsub.f32 %v1134, %v1181
        %v1205 = vsub.f32 %v1137, %v1183
        %v1206 = vsub.f32 %v1142, %v1185
        %v1207 = vsub.f32 %v1145, %v1187
        %v1208 = vsub.f32 %v1150, %v1189
        %v1209 = vsub.f32 %v1153, %v1191
        %v1210 = vsub.f32 %v1158, %v1193
        %v1211 = vsub.f32 %v1161, %v1195
        %v1212 = vmul.f32 %v1196, 1.442695
        %v1213 = vpow.pop %v1212
        %v1214 = vmul.f32 %v1197, 1.442695
        %v1215 = vpow.pop %v1214
        %v1216 = vmul.f32 %v1198, 1.442695
        %v1217 = vpow.pop %v1216
        %v1218 = vmul.f32 %v1199, 1.442695
        %v1219 = vpow.pop %v1218
        %v1220 = vmul.f32 %v1200, 1.442695
        %v1221 = vpow.pop %v1220
        %v1222 = vmul.f32 %v1201, 1.442695
        %v1223 = vpow.pop %v1222
        %v1224 = vmul.f32 %v1202, 1.442695
        %v1225 = vpow.pop %v1224
        %v1226 = vmul.f32 %v1203, 1.442695
        %v1227 = vpow.pop %v1226
        %v1228 = vmul.f32 %v1204, 1.442695
        %v1229 = vpow.pop %v1228
        %v1230 = vmul.f32 %v1205, 1.442695
        %v1231 = vpow.pop %v1230
        %v1232 = vmul.f32 %v1206, 1.442695
        %v1233 = vpow.pop %v1232
        %v1234 = vmul.f32 %v1207, 1.442695
        %v1235 = vpow.pop %v1234
        %v1236 = vmul.f32 %v1208, 1.442695
        %v1237 = vpow.pop %v1236
        %v1238 = vmul.f32 %v1209, 1.442695
        %v1239 = vpow.pop %v1238
        %v1240 = vmul.f32 %v1210, 1.442695
        %v1241 = vpow.pop %v1240
        %v1242 = vmul.f32 %v1211, 1.442695
        %v1243 = vpow.pop %v1242
        %1244 = vadd.xlane.f32.xlu0 %v1213
        %v1245 = vpop.xlane.xlu0 %1244
        %1246 = vadd.xlane.f32.xlu0 %v1215
        %v1247 = vpop.xlane.xlu0 %1246
        %1248 = vadd.xlane.f32.xlu0 %v1217
        %v1249 = vpop.xlane.xlu0 %1248
        %1250 = vadd.xlane.f32.xlu0 %v1219
        %v1251 = vpop.xlane.xlu0 %1250
        %1252 = vadd.xlane.f32.xlu0 %v1221
        %v1253 = vpop.xlane.xlu0 %1252
        %1254 = vadd.xlane.f32.xlu0 %v1223
        %v1255 = vpop.xlane.xlu0 %1254
        %1256 = vadd.xlane.f32.xlu0 %v1225
        %v1257 = vpop.xlane.xlu0 %1256
        %1258 = vadd.xlane.f32.xlu0 %v1227
        %v1259 = vpop.xlane.xlu0 %1258
        %1260 = vadd.xlane.f32.xlu0 %v1229
        %v1261 = vpop.xlane.xlu0 %1260
        %1262 = vadd.xlane.f32.xlu0 %v1231
        %v1263 = vpop.xlane.xlu0 %1262
        %1264 = vadd.xlane.f32.xlu0 %v1233
        %v1265 = vpop.xlane.xlu0 %1264
        %1266 = vadd.xlane.f32.xlu0 %v1235
        %v1267 = vpop.xlane.xlu0 %1266
        %1268 = vadd.xlane.f32.xlu0 %v1237
        %v1269 = vpop.xlane.xlu0 %1268
        %1270 = vadd.xlane.f32.xlu0 %v1239
        %v1271 = vpop.xlane.xlu0 %1270
        %1272 = vadd.xlane.f32.xlu0 %v1241
        %v1273 = vpop.xlane.xlu0 %1272
        %1274 = vadd.xlane.f32.xlu0 %v1243
        %v1275 = vpop.xlane.xlu0 %1274
        %v1276 = vrcp.pop %v1245
        %v1277 = vrcp.pop %v1247
        %v1278 = vrcp.pop %v1249
        %v1279 = vrcp.pop %v1251
        %v1280 = vrcp.pop %v1253
        %v1281 = vrcp.pop %v1255
        %v1282 = vrcp.pop %v1257
        %v1283 = vrcp.pop %v1259
        %v1284 = vrcp.pop %v1261
        %v1285 = vrcp.pop %v1263
        %v1286 = vrcp.pop %v1265
        %v1287 = vrcp.pop %v1267
        %v1288 = vrcp.pop %v1269
        %v1289 = vrcp.pop %v1271
        %v1290 = vrcp.pop %v1273
        %v1291 = vrcp.pop %v1275
        %v1292 = vmul.f32 %v1213, %v1276
        %v1293 = vmul.f32 %v1215, %v1277
        %v1294 = vmul.f32 %v1217, %v1278
        %v1295 = vmul.f32 %v1219, %v1279
        %v1296 = vmul.f32 %v1221, %v1280
        %v1297 = vmul.f32 %v1223, %v1281
        %v1298 = vmul.f32 %v1225, %v1282
        %v1299 = vmul.f32 %v1227, %v1283
        %v1300 = vmul.f32 %v1229, %v1284
        %v1301 = vmul.f32 %v1231, %v1285
        %v1302 = vmul.f32 %v1233, %v1286
        %v1303 = vmul.f32 %v1235, %v1287
        %v1304 = vmul.f32 %v1237, %v1288
        %v1305 = vmul.f32 %v1239, %v1289
        %v1306 = vmul.f32 %v1241, %v1290
        %v1307 = vmul.f32 %v1243, %v1291
        %v1308 = vpack.c.bf16 %v1293, %v1292
        %v1309 = vpack.c.bf16 %v1295, %v1294
        %v1310 = vpack.c.bf16 %v1297, %v1296
        %v1311 = vpack.c.bf16 %v1299, %v1298
        %v1312 = vpack.c.bf16 %v1301, %v1300
        %v1313 = vpack.c.bf16 %v1303, %v1302
        %v1314 = vpack.c.bf16 %v1305, %v1304
        %v1315 = vpack.c.bf16 %v1307, %v1306
        %1316 = vmatprep.subr.bf16.mxu0 0
        %1317 = vmatpush1.bf16.xpose.msra.mxu0 %v1308
        %1318 = vmatprep.subr.bf16.mxu0 0
        %1319 = vmatpush1.bf16.xpose.msra.mxu0 %v1309
        %1320 = vmatprep.subr.bf16.mxu0 0
        %1321 = vmatpush1.bf16.xpose.msra.mxu0 %v1310
        %1322 = vmatprep.subr.bf16.mxu0 0
        %1323 = vmatpush1.bf16.xpose.msra.mxu0 %v1311
        %1324 = vmatprep.subr.bf16.mxu0 0
        %1325 = vmatpush1.bf16.xpose.msra.mxu0 %v1312
        %1326 = vmatprep.subr.bf16.mxu0 0
        %1327 = vmatpush1.bf16.xpose.msra.mxu0 %v1313
        %1328 = vmatprep.subr.bf16.mxu0 0
        %1329 = vmatpush1.bf16.xpose.msra.mxu0 %v1314
        %1330 = vmatprep.subr.bf16.mxu0 0
        %1331 = vmatpush1.bf16.xpose.msra.mxu0 %v1315
        %1332 = vmatprep.subr.bf16.mxu0 0
        %1333 = vmatpush1.bf16.xpose.msra.mxu0 0
        %1334 = vmatprep.subr.bf16.mxu0 0
        %1335 = vmatpush1.bf16.xpose.msra.mxu0 0
        %1336 = vmatprep.subr.bf16.mxu0 0
        %1337 = vmatpush1.bf16.xpose.msra.mxu0 0
        %1338 = vmatprep.subr.bf16.mxu0 0
        %1339 = vmatpush1.bf16.xpose.msra.mxu0 0
        %1340 = vmatprep.subr.bf16.mxu0 0
        %1341 = vmatpush1.bf16.xpose.msra.mxu0 0
        %1342 = vmatprep.subr.bf16.mxu0 0
        %1343 = vmatpush1.bf16.xpose.msra.mxu0 0
        %1344 = vmatprep.subr.bf16.mxu0 0
        %1345 = vmatpush1.bf16.xpose.msra.mxu0 0
        %1346 = vmatprep.subr.bf16.mxu0 0
        %1347 = vmatpush1.bf16.xpose.msra.mxu0 0
        %1348 = vmatprep.mubr.bf16.mxu0 0
        %1349 = vmatmul.mubr.bf16.gmra.mrb[0].mxu0 %v344
        %v1350 = vpop.f32.mrb[0].mxu0
        %v1351 = vadd.f32 0.0, %v1350
        %v1352 = vpop.f32.mrb[0].mxu0
        %v1353 = vpop.f32.mrb[0].mxu0
        %v1354 = vpop.f32.mrb[0].mxu0
        %1355 = vdwg.mxu0
        %1356 = vst [vmem:[%s176 + $0x10] sm:$0xff] %v1351
        %v1358 = vrot.slane %v344, 4
        %1360 = vxpose.xlu0.c.b16.start [1/8] %v1358, 128
        %1361 = vxpose.xlu0.c.b16.cont [2/8] 0, 128
        %1362 = vxpose.xlu0.c.b16.cont [3/8] 0, 128
        %1363 = vxpose.xlu0.c.b16.cont [4/8] 0, 128
        %1364 = vxpose.xlu0.c.b16.cont [5/8] 0, 128
        %1365 = vxpose.xlu0.c.b16.cont [6/8] 0, 128
        %1366 = vxpose.xlu0.c.b16.cont [7/8] 0, 128
        %1367 = vxpose.xlu0.c.b16.end [8/8] 0, 128
        %v1368 = vpop.trf.xlu0
        %v1369 = vpop.trf.xlu0
        %v1370 = vpop.trf.xlu0
        %v1371 = vpop.trf.xlu0
        %v1372 = vpop.trf.xlu0
        %v1373 = vpop.trf.xlu0
        %v1374 = vpop.trf.xlu0
        %v1375 = vpop.trf.xlu0
        %v1377 = vsel %vm364, %v1368, 0
        %v1380 = vsel %vm364, %v1369, 0
        %v1383 = vsel %vm364, %v1370, 0
        %v1386 = vsel %vm364, %v1371, 0
        %v1389 = vsel %vm364, %v1372, 0
        %v1392 = vsel %vm364, %v1373, 0
        %v1395 = vsel %vm364, %v1374, 0
        %v1398 = vsel %vm364, %v1375, 0
        %v1401 = vsel %vm389, %v345, 0
        %1403 = vmatprep.subr.bf16.mxu0 0
        %1404 = vmatpush1.bf16.msra.mxu0 %v1401
        %1405 = vmatprep.subr.bf16.mxu0 0
        %1406 = vmatpush1.bf16.msra.mxu0 0
        %1407 = vmatprep.subr.bf16.mxu0 0
        %1408 = vmatpush1.bf16.msra.mxu0 0
        %1409 = vmatprep.subr.bf16.mxu0 0
        %1410 = vmatpush1.bf16.msra.mxu0 0
        %1411 = vmatprep.subr.bf16.mxu0 0
        %1412 = vmatpush1.bf16.msra.mxu0 0
        %1413 = vmatprep.subr.bf16.mxu0 0
        %1414 = vmatpush1.bf16.msra.mxu0 0
        %1415 = vmatprep.subr.bf16.mxu0 0
        %1416 = vmatpush1.bf16.msra.mxu0 0
        %1417 = vmatprep.subr.bf16.mxu0 0
        %1418 = vmatpush1.bf16.msra.mxu0 0
        %1419 = vmatprep.subr.bf16.mxu0 0
        %1420 = vmatpush1.bf16.msra.mxu0 0
        %1421 = vmatprep.subr.bf16.mxu0 0
        %1422 = vmatpush1.bf16.msra.mxu0 0
        %1423 = vmatprep.subr.bf16.mxu0 0
        %1424 = vmatpush1.bf16.msra.mxu0 0
        %1425 = vmatprep.subr.bf16.mxu0 0
        %1426 = vmatpush1.bf16.msra.mxu0 0
        %1427 = vmatprep.subr.bf16.mxu0 0
        %1428 = vmatpush1.bf16.msra.mxu0 0
        %1429 = vmatprep.subr.bf16.mxu0 0
        %1430 = vmatpush1.bf16.msra.mxu0 0
        %1431 = vmatprep.subr.bf16.mxu0 0
        %1432 = vmatpush1.bf16.msra.mxu0 0
        %1433 = vmatprep.subr.bf16.mxu0 0
        %1434 = vmatpush1.bf16.msra.mxu0 0
        %1435 = vmatprep.mubr.bf16.mxu0 0
        %1436 = vmatmul.mubr.bf16.gmra.mrb[0].mxu0 %v1377
        %v1437 = vpop.f32.mrb[0].mxu0
        %v1438 = vadd.f32 %v193, %v1437
        %v1439 = vpop.f32.mrb[0].mxu0
        %v1440 = vpop.f32.mrb[0].mxu0
        %v1441 = vadd.f32 %v193, %v1440
        %v1442 = vpop.f32.mrb[0].mxu0
        %1443 = vmatprep.mubr.bf16.mxu0 0
        %1444 = vmatmul.mubr.bf16.gmra.mrb[0].mxu0 %v1380
        %v1445 = vpop.f32.mrb[0].mxu0
        %v1446 = vadd.f32 %v193, %v1445
        %v1447 = vpop.f32.mrb[0].mxu0
        %v1448 = vpop.f32.mrb[0].mxu0
        %v1449 = vadd.f32 %v193, %v1448
        %v1450 = vpop.f32.mrb[0].mxu0
        %1451 = vmatprep.mubr.bf16.mxu0 0
        %1452 = vmatmul.mubr.bf16.gmra.mrb[0].mxu0 %v1383
        %v1453 = vpop.f32.mrb[0].mxu0
        %v1454 = vadd.f32 %v193, %v1453
        %v1455 = vpop.f32.mrb[0].mxu0
        %v1456 = vpop.f32.mrb[0].mxu0
        %v1457 = vadd.f32 %v193, %v1456
        %v1458 = vpop.f32.mrb[0].mxu0
        %1459 = vmatprep.mubr.bf16.mxu0 0
        %1460 = vmatmul.mubr.bf16.gmra.mrb[0].mxu0 %v1386
        %v1461 = vpop.f32.mrb[0].mxu0
        %v1462 = vadd.f32 %v193, %v1461
        %v1463 = vpop.f32.mrb[0].mxu0
        %v1464 = vpop.f32.mrb[0].mxu0
        %v1465 = vadd.f32 %v193, %v1464
        %v1466 = vpop.f32.mrb[0].mxu0
        %1467 = vmatprep.mubr.bf16.mxu0 0
        %1468 = vmatmul.mubr.bf16.gmra.mrb[0].mxu0 %v1389
        %v1469 = vpop.f32.mrb[0].mxu0
        %v1470 = vadd.f32 %v193, %v1469
        %v1471 = vpop.f32.mrb[0].mxu0
        %v1472 = vpop.f32.mrb[0].mxu0
        %v1473 = vadd.f32 %v193, %v1472
        %v1474 = vpop.f32.mrb[0].mxu0
        %1475 = vmatprep.mubr.bf16.mxu0 0
        %1476 = vmatmul.mubr.bf16.gmra.mrb[0].mxu0 %v1392
        %v1477 = vpop.f32.mrb[0].mxu0
        %v1478 = vadd.f32 %v193, %v1477
        %v1479 = vpop.f32.mrb[0].mxu0
        %v1480 = vpop.f32.mrb[0].mxu0
        %v1481 = vadd.f32 %v193, %v1480
        %v1482 = vpop.f32.mrb[0].mxu0
        %1483 = vmatprep.mubr.bf16.mxu0 0
        %1484 = vmatmul.mubr.bf16.gmra.mrb[0].mxu0 %v1395
        %v1485 = vpop.f32.mrb[0].mxu0
        %v1486 = vadd.f32 %v193, %v1485
        %v1487 = vpop.f32.mrb[0].mxu0
        %v1488 = vpop.f32.mrb[0].mxu0
        %v1489 = vadd.f32 %v193, %v1488
        %v1490 = vpop.f32.mrb[0].mxu0
        %1491 = vmatprep.mubr.bf16.mxu0 0
        %1492 = vmatmul.mubr.bf16.gmra.mrb[0].mxu0 %v1398
        %v1493 = vpop.f32.mrb[0].mxu0
        %v1494 = vadd.f32 %v193, %v1493
        %v1495 = vpop.f32.mrb[0].mxu0
        %v1496 = vpop.f32.mrb[0].mxu0
        %v1497 = vadd.f32 %v193, %v1496
        %v1498 = vpop.f32.mrb[0].mxu0
        %1499 = vdwg.mxu0
        %1500 = vmax.xlane.f32.xlu0 %v1438
        %v1501 = vpop.xlane.xlu0 %1500
        %1502 = vmax.xlane.f32.xlu0 %v1441
        %v1503 = vpop.xlane.xlu0 %1502
        %1504 = vmax.xlane.f32.xlu0 %v1446
        %v1505 = vpop.xlane.xlu0 %1504
        %1506 = vmax.xlane.f32.xlu0 %v1449
        %v1507 = vpop.xlane.xlu0 %1506
        %1508 = vmax.xlane.f32.xlu0 %v1454
        %v1509 = vpop.xlane.xlu0 %1508
        %1510 = vmax.xlane.f32.xlu0 %v1457
        %v1511 = vpop.xlane.xlu0 %1510
        %1512 = vmax.xlane.f32.xlu0 %v1462
        %v1513 = vpop.xlane.xlu0 %1512
        %1514 = vmax.xlane.f32.xlu0 %v1465
        %v1515 = vpop.xlane.xlu0 %1514
        %1516 = vmax.xlane.f32.xlu0 %v1470
        %v1517 = vpop.xlane.xlu0 %1516
        %1518 = vmax.xlane.f32.xlu0 %v1473
        %v1519 = vpop.xlane.xlu0 %1518
        %1520 = vmax.xlane.f32.xlu0 %v1478
        %v1521 = vpop.xlane.xlu0 %1520
        %1522 = vmax.xlane.f32.xlu0 %v1481
        %v1523 = vpop.xlane.xlu0 %1522
        %1524 = vmax.xlane.f32.xlu0 %v1486
        %v1525 = vpop.xlane.xlu0 %1524
        %1526 = vmax.xlane.f32.xlu0 %v1489
        %v1527 = vpop.xlane.xlu0 %1526
        %1528 = vmax.xlane.f32.xlu0 %v1494
        %v1529 = vpop.xlane.xlu0 %1528
        %1530 = vmax.xlane.f32.xlu0 %v1497
        %v1531 = vpop.xlane.xlu0 %1530
        %v1532 = vsub.f32 %v1438, %v1501
        %v1533 = vsub.f32 %v1441, %v1503
        %v1534 = vsub.f32 %v1446, %v1505
        %v1535 = vsub.f32 %v1449, %v1507
        %v1536 = vsub.f32 %v1454, %v1509
        %v1537 = vsub.f32 %v1457, %v1511
        %v1538 = vsub.f32 %v1462, %v1513
        %v1539 = vsub.f32 %v1465, %v1515
        %v1540 = vsub.f32 %v1470, %v1517
        %v1541 = vsub.f32 %v1473, %v1519
        %v1542 = vsub.f32 %v1478, %v1521
        %v1543 = vsub.f32 %v1481, %v1523
        %v1544 = vsub.f32 %v1486, %v1525
        %v1545 = vsub.f32 %v1489, %v1527
        %v1546 = vsub.f32 %v1494, %v1529
        %v1547 = vsub.f32 %v1497, %v1531
        %v1548 = vmul.f32 %v1532, 1.442695
        %v1549 = vpow.pop %v1548
        %v1550 = vmul.f32 %v1533, 1.442695
        %v1551 = vpow.pop %v1550
        %v1552 = vmul.f32 %v1534, 1.442695
        %v1553 = vpow.pop %v1552
        %v1554 = vmul.f32 %v1535, 1.442695
        %v1555 = vpow.pop %v1554
        %v1556 = vmul.f32 %v1536, 1.442695
        %v1557 = vpow.pop %v1556
        %v1558 = vmul.f32 %v1537, 1.442695
        %v1559 = vpow.pop %v1558
        %v1560 = vmul.f32 %v1538, 1.442695
        %v1561 = vpow.pop %v1560
        %v1562 = vmul.f32 %v1539, 1.442695
        %v1563 = vpow.pop %v1562
        %v1564 = vmul.f32 %v1540, 1.442695
        %v1565 = vpow.pop %v1564
        %v1566 = vmul.f32 %v1541, 1.442695
        %v1567 = vpow.pop %v1566
        %v1568 = vmul.f32 %v1542, 1.442695
        %v1569 = vpow.pop %v1568
        %v1570 = vmul.f32 %v1543, 1.442695
        %v1571 = vpow.pop %v1570
        %v1572 = vmul.f32 %v1544, 1.442695
        %v1573 = vpow.pop %v1572
        %v1574 = vmul.f32 %v1545, 1.442695
        %v1575 = vpow.pop %v1574
        %v1576 = vmul.f32 %v1546, 1.442695
        %v1577 = vpow.pop %v1576
        %v1578 = vmul.f32 %v1547, 1.442695
        %v1579 = vpow.pop %v1578
        %1580 = vadd.xlane.f32.xlu0 %v1549
        %v1581 = vpop.xlane.xlu0 %1580
        %1582 = vadd.xlane.f32.xlu0 %v1551
        %v1583 = vpop.xlane.xlu0 %1582
        %1584 = vadd.xlane.f32.xlu0 %v1553
        %v1585 = vpop.xlane.xlu0 %1584
        %1586 = vadd.xlane.f32.xlu0 %v1555
        %v1587 = vpop.xlane.xlu0 %1586
        %1588 = vadd.xlane.f32.xlu0 %v1557
        %v1589 = vpop.xlane.xlu0 %1588
        %1590 = vadd.xlane.f32.xlu0 %v1559
        %v1591 = vpop.xlane.xlu0 %1590
        %1592 = vadd.xlane.f32.xlu0 %v1561
        %v1593 = vpop.xlane.xlu0 %1592
        %1594 = vadd.xlane.f32.xlu0 %v1563
        %v1595 = vpop.xlane.xlu0 %1594
        %1596 = vadd.xlane.f32.xlu0 %v1565
        %v1597 = vpop.xlane.xlu0 %1596
        %1598 = vadd.xlane.f32.xlu0 %v1567
        %v1599 = vpop.xlane.xlu0 %1598
        %1600 = vadd.xlane.f32.xlu0 %v1569
        %v1601 = vpop.xlane.xlu0 %1600
        %1602 = vadd.xlane.f32.xlu0 %v1571
        %v1603 = vpop.xlane.xlu0 %1602
        %1604 = vadd.xlane.f32.xlu0 %v1573
        %v1605 = vpop.xlane.xlu0 %1604
        %1606 = vadd.xlane.f32.xlu0 %v1575
        %v1607 = vpop.xlane.xlu0 %1606
        %1608 = vadd.xlane.f32.xlu0 %v1577
        %v1609 = vpop.xlane.xlu0 %1608
        %1610 = vadd.xlane.f32.xlu0 %v1579
        %v1611 = vpop.xlane.xlu0 %1610
        %v1612 = vrcp.pop %v1581
        %v1613 = vrcp.pop %v1583
        %v1614 = vrcp.pop %v1585
        %v1615 = vrcp.pop %v1587
        %v1616 = vrcp.pop %v1589
        %v1617 = vrcp.pop %v1591
        %v1618 = vrcp.pop %v1593
        %v1619 = vrcp.pop %v1595
        %v1620 = vrcp.pop %v1597
        %v1621 = vrcp.pop %v1599
        %v1622 = vrcp.pop %v1601
        %v1623 = vrcp.pop %v1603
        %v1624 = vrcp.pop %v1605
        %v1625 = vrcp.pop %v1607
        %v1626 = vrcp.pop %v1609
        %v1627 = vrcp.pop %v1611
        %v1628 = vmul.f32 %v1549, %v1612
        %v1629 = vmul.f32 %v1551, %v1613
        %v1630 = vmul.f32 %v1553, %v1614
        %v1631 = vmul.f32 %v1555, %v1615
        %v1632 = vmul.f32 %v1557, %v1616
        %v1633 = vmul.f32 %v1559, %v1617
        %v1634 = vmul.f32 %v1561, %v1618
        %v1635 = vmul.f32 %v1563, %v1619
        %v1636 = vmul.f32 %v1565, %v1620
        %v1637 = vmul.f32 %v1567, %v1621
        %v1638 = vmul.f32 %v1569, %v1622
        %v1639 = vmul.f32 %v1571, %v1623
        %v1640 = vmul.f32 %v1573, %v1624
        %v1641 = vmul.f32 %v1575, %v1625
        %v1642 = vmul.f32 %v1577, %v1626
        %v1643 = vmul.f32 %v1579, %v1627
        %v1644 = vpack.c.bf16 %v1629, %v1628
        %v1645 = vpack.c.bf16 %v1631, %v1630
        %v1646 = vpack.c.bf16 %v1633, %v1632
        %v1647 = vpack.c.bf16 %v1635, %v1634
        %v1648 = vpack.c.bf16 %v1637, %v1636
        %v1649 = vpack.c.bf16 %v1639, %v1638
        %v1650 = vpack.c.bf16 %v1641, %v1640
        %v1651 = vpack.c.bf16 %v1643, %v1642
        %v1653 = vrot.slane %v345, 4
        %1655 = vmatprep.subr.bf16.mxu0 0
        %1656 = vmatpush1.bf16.xpose.msra.mxu0 %v1644
        %1657 = vmatprep.subr.bf16.mxu0 0
        %1658 = vmatpush1.bf16.xpose.msra.mxu0 %v1645
        %1659 = vmatprep.subr.bf16.mxu0 0
        %1660 = vmatpush1.bf16.xpose.msra.mxu0 %v1646
        %1661 = vmatprep.subr.bf16.mxu0 0
        %1662 = vmatpush1.bf16.xpose.msra.mxu0 %v1647
        %1663 = vmatprep.subr.bf16.mxu0 0
        %1664 = vmatpush1.bf16.xpose.msra.mxu0 %v1648
        %1665 = vmatprep.subr.bf16.mxu0 0
        %1666 = vmatpush1.bf16.xpose.msra.mxu0 %v1649
        %1667 = vmatprep.subr.bf16.mxu0 0
        %1668 = vmatpush1.bf16.xpose.msra.mxu0 %v1650
        %1669 = vmatprep.subr.bf16.mxu0 0
        %1670 = vmatpush1.bf16.xpose.msra.mxu0 %v1651
        %1671 = vmatprep.subr.bf16.mxu0 0
        %1672 = vmatpush1.bf16.xpose.msra.mxu0 0
        %1673 = vmatprep.subr.bf16.mxu0 0
        %1674 = vmatpush1.bf16.xpose.msra.mxu0 0
        %1675 = vmatprep.subr.bf16.mxu0 0
        %1676 = vmatpush1.bf16.xpose.msra.mxu0 0
        %1677 = vmatprep.subr.bf16.mxu0 0
        %1678 = vmatpush1.bf16.xpose.msra.mxu0 0
        %1679 = vmatprep.subr.bf16.mxu0 0
        %1680 = vmatpush1.bf16.xpose.msra.mxu0 0
        %1681 = vmatprep.subr.bf16.mxu0 0
        %1682 = vmatpush1.bf16.xpose.msra.mxu0 0
        %1683 = vmatprep.subr.bf16.mxu0 0
        %1684 = vmatpush1.bf16.xpose.msra.mxu0 0
        %1685 = vmatprep.subr.bf16.mxu0 0
        %1686 = vmatpush1.bf16.xpose.msra.mxu0 0
        %1687 = vmatprep.mubr.bf16.mxu0 0
        %1688 = vmatmul.mubr.bf16.gmra.mrb[0].mxu0 %v1653
        %v1689 = vpop.f32.mrb[0].mxu0
        %v1690 = vadd.f32 0.0, %v1689
        %v1691 = vpop.f32.mrb[0].mxu0
        %v1692 = vpop.f32.mrb[0].mxu0
        %v1693 = vpop.f32.mrb[0].mxu0
        %1694 = vdwg.mxu0
        %1695 = vst [vmem:[%s176 + $0x18] sm:$0xff] %v1690
        %s1696 = sand.u32 %s75, 1
        %s1697 = scalar_lea.sflag [#allocation4], %s1696
        %s1698 = sand.u32 %s75, 1
        %s1699 = smul.addr %s1698, 32
        %s1700 = scalar_lea.vmem [#allocation7], %s1699
        // Predicated region
        $region37: #{global_sparse_attention.1} parent=27 // pred_check
          %p1701 = pneg %p85
        $region38: #{global_sparse_attention.1} parent=27 // pred_check_branch
          %1703 = sbr.rel (%p1701) target = $region40
        $region39: #{global_sparse_attention.1} parent=27 // pred_region
          %s1705 = ssub.s32 512, 512
          %1706 = vsyncadd %s1697, %s1705
          %s1707 = smul.addr %s20, 4
          %s1708 = smul.addr %s1707, 128
          %s1709 = scalar_lea.hbm %s2, %s1708
          %s1710 = sshll.u32 %s1700, 4
          %s1711 = int_to_ptr.vmem [resolvable:$true] %s1710
          %1716 = dma.vmem_to_hbm [thread:$0]  %s1711, 512, %s1709, %s1697, 128, 128, 8
        $region40: #{global_sparse_attention.1} parent=27 // pred_fallthru
          _
      $region28: #{global_sparse_attention.1} parent=5 // pred_fallthru
        _
      %p1717 = scmp.le.s32.totalorder 2, %s15
      // Predicated region
      $region41: #{global_sparse_attention.1} parent=5 // pred_check
        %p1718 = pneg %p1717
      $region42: #{global_sparse_attention.1} parent=5 // pred_check_branch
        %1720 = sbr.rel (%p1718) target = $region44
      $region43: #{global_sparse_attention.1} parent=5 // pred_region
        %s1721 = ssub.s32 %s15, 2
        // Predicated region
        $region45: #{global_sparse_attention.1} parent=43 // pred_check
          %p1722 = pneg %p91
        $region46: #{global_sparse_attention.1} parent=43 // pred_check_branch
          %1724 = sbr.rel (%p1722) target = $region48
        $region47: #{global_sparse_attention.1} parent=43 // pred_region
          %s1725 = sand.u32 %s76, 1
          %s1726 = scalar_lea.sflag [#allocation4], %s1725
          %s1727 = sand.u32 %s76, 1
          %s1728 = smul.addr %s1727, 32
          %s1729 = scalar_lea.vmem [#allocation7], %s1728
          %1730 = dma.done %s1726, 512
        $region48: #{global_sparse_attention.1} parent=43 // pred_fallthru
          _
      $region44: #{global_sparse_attention.1} parent=5 // pred_fallthru
        _
    $region6: #{global_sparse_attention.1} parent=1 // loop_footer
      %s19 = sadd.s32 1, %s15
    $region7: #{global_sparse_attention.1} parent=1 // loop_footer_branch
      %14 = sbr.rel target = $region3
    $region8: #{global_sparse_attention.1} parent=1 // loop_exit
      _
    %1731 = vsyncpa [#allocation3], 1
    %s1732 = scalar_lea.sflag [#allocation3], 1
    %1733 = vsyncpa %s1732, 1
    %1734 = vsyncpa [#allocation6], 1
    %1735 = vsyncpa [#allocation4], 1
    %s1736 = scalar_lea.sflag [#allocation4], 1
    %1737 = vsyncpa %s1736, 1

</llo_original>
